<compile_context>
chip_gen: v7x
topology: tpu7x:2x2x1
jax: 0.10.0
libtpu: 0.0.40
codegen_flags: <defaults>
</compile_context>

<pallas_src>
import functools

import jax
import jax.numpy as jnp
import numpy as np
from jax import lax
from jax.experimental import pallas as pl
from jax.experimental.pallas import tpu as pltpu

C_IN = 256 + 128      # 384
C_MID = 128
C_OUT = 128
KH = KW = 3
NEG_SLOPE = 0.1


def _leaky_relu(x):
    # 0 < slope < 1  =>  leaky_relu(x) == max(x, slope*x)
    return jnp.maximum(x, NEG_SLOPE * x)


def _roiconv_kernel(x_ref, w1_ref, w2_ref, o_ref, *, W_pad):
    """x_ref: (M, 384) bf16, w1_ref: (384,128) bf16, w2_ref: (1152,128) bf16,
    o_ref: (M, 128) f32.  M = block_b * H_pad * W_pad (zero-padded layout)."""
    M = x_ref.shape[0]

    # --- 1x1 conv (no bias) + LeakyReLU(0.1): one MXU matmul ---------------
    h = jnp.dot(x_ref[...], w1_ref[...],
                preferred_element_type=jnp.float32)          # (M, 128) f32
    h = _leaky_relu(h)
    # Padding rows/cols of x are zero -> h is exactly zero there, which is
    # what the 3x3 "same" conv needs at the image borders.

    # --- 3x3 conv, stride 1, pad 1 (no bias) as ONE K=1152 matmul ----------
    # tap(dy,dx)[p] = h[p + dy*W_pad + dx]  (cyclic; wrap/overflow only ever
    # reads zero padding rows/cols, so no masks are needed).
    taps = []
    for dy in (-1, 0, 1):
        for dx in (-1, 0, 1):
            shift = (-(dy * W_pad + dx)) % M       # non-negative static shift
            t = h if shift == 0 else pltpu.roll(h, shift=shift, axis=0)
            taps.append(t.astype(jnp.bfloat16))
    taps = jnp.concatenate(taps, axis=-1)                    # (M, 1152) bf16

    y = jnp.dot(taps, w2_ref[...],
                preferred_element_type=jnp.float32)          # (M, 128) f32
    o_ref[...] = _leaky_relu(y).astype(o_ref.dtype)


def lpr_classifier1_forward(x_nchw, w1, w2, *, block_b=None):
    """x_nchw: (B, 384, H, W) f32; w1: (128, 384, 1, 1); w2: (128, 128, 3, 3).
    Returns (B, 128, H, W) f32, matching LPR_Classifer1.forward."""
    B, C, H, W = x_nchw.shape
    assert C == C_IN

    # Zero-padded spatial grid: >=1 pad col / row guarantees every 3x3 tap
    # that leaves the image lands on zeros; total rows rounded to a multiple
    # of 8 for sublane alignment.
    W_pad = W + 2
    H_pad = H + 2
    while (H_pad * W_pad) % 8:
        H_pad += 1
    HW_pad = H_pad * W_pad

    if block_b is None:
        block_b = max(1, B // 2)     # >=2 grid steps when B>=2 (v7x megacore)
    while B % block_b:               # must divide the batch evenly
        block_b -= 1
    M_blk = block_b * HW_pad
    M_total = B * HW_pad

    # NCHW -> channels-last, zero-pad spatial, flatten (batch folded into M),
    # cast activations to bf16 once (MXU operands, f32 accumulation).
    x_cl = jnp.transpose(x_nchw, (0, 2, 3, 1))               # (B, H, W, C)
    x_cl = jnp.pad(x_cl, ((0, 0), (0, H_pad - H), (0, W_pad - W), (0, 0)))
    x_flat = x_cl.reshape(M_total, C_IN).astype(jnp.bfloat16)

    # (Cout, Cin, 1, 1) -> (Cin, Cout)
    w1_k = jnp.transpose(w1.reshape(C_MID, C_IN), (1, 0)).astype(jnp.bfloat16)
    # (Cout, Cin, 3, 3) -> (kh, kw, Cin, Cout) -> (9*Cin, Cout): row block
    # k = ki*3+kj matches the tap concatenation order in the kernel.
    w2_k = (jnp.transpose(w2, (2, 3, 1, 0))
            .reshape(KH * KW * C_MID, C_OUT).astype(jnp.bfloat16))

    out_flat = pl.pallas_call(
        functools.partial(_roiconv_kernel, W_pad=W_pad),
        out_shape=jax.ShapeDtypeStruct((M_total, C_OUT), jnp.float32),
        grid_spec=pltpu.PrefetchScalarGridSpec(
            num_scalar_prefetch=0,
            grid=(B // block_b,),
            in_specs=[
                pl.BlockSpec((M_blk, C_IN), lambda m: (m, 0)),
                pl.BlockSpec((C_IN, C_MID), lambda m: (0, 0)),
                pl.BlockSpec((KH * KW * C_MID, C_OUT), lambda m: (0, 0)),
            ],
            out_specs=pl.BlockSpec((M_blk, C_OUT), lambda m: (m, 0)),
        ),
        compiler_params=pltpu.CompilerParams(
            dimension_semantics=("parallel",),   # independent M blocks
        ),
    )(x_flat, w1_k, w2_k)

    # (M_total, 128) -> strip spatial padding -> NCHW
    out = out_flat.reshape(B, H_pad, W_pad, C_OUT)[:, :H, :W, :]
    return jnp.transpose(out, (0, 3, 1, 2))


# ----------------------------- references ----------------------------------
def _reference_f32(x_nchw, w1, w2):
    dn = ("NCHW", "OIHW", "NCHW")
    h = lax.conv_general_dilated(x_nchw, w1, (1, 1), "VALID",
                                 dimension_numbers=dn,
                                 precision=lax.Precision.HIGHEST)
    h = _leaky_relu(h)
    o = lax.conv_general_dilated(h, w2, (1, 1), ((1, 1), (1, 1)),
                                 dimension_numbers=dn,
                                 precision=lax.Precision.HIGHEST)
    return _leaky_relu(o)


def _reference_bf16_matched(x_nchw, w1, w2):
    """Same operand quantization as the kernel (bf16 operands, f32 accum)."""
    q = lambda a: a.astype(jnp.bfloat16).astype(jnp.float32)
    dn = ("NCHW", "OIHW", "NCHW")
    h = lax.conv_general_dilated(q(x_nchw), q(w1), (1, 1), "VALID",
                                 dimension_numbers=dn,
                                 precision=lax.Precision.HIGHEST)
    h = _leaky_relu(h)
    o = lax.conv_general_dilated(q(h), q(w2), (1, 1), ((1, 1), (1, 1)),
                                 dimension_numbers=dn,
                                 precision=lax.Precision.HIGHEST)
    return _leaky_relu(o)


if __name__ == "__main__":
    key = jax.random.PRNGKey(0)
    kx, k1, k2 = jax.random.split(key, 3)

    B, H, W = 2, 14, 14          # small ROI-sized feature map
    x = jax.random.normal(kx, (B, C_IN, H, W), jnp.float32)

    # PyTorch Conv2d default init: U(-1/sqrt(fan_in), 1/sqrt(fan_in)).
    b1 = 1.0 / np.sqrt(C_IN * 1 * 1)
    w1 = jax.random.uniform(k1, (C_MID, C_IN, 1, 1), jnp.float32, -b1, b1)
    b2 = 1.0 / np.sqrt(C_MID * KH * KW)
    w2 = jax.random.uniform(k2, (C_OUT, C_MID, KH, KW), jnp.float32, -b2, b2)

    fwd = jax.jit(lpr_classifier1_forward)
    out = jax.block_until_ready(fwd(x, w1, w2))
    assert out.shape == (B, C_OUT, H, W)

    # Tight check vs a reference with identical operand quantization.
    ref_q = _reference_bf16_matched(x, w1, w2)
    np.testing.assert_allclose(np.asarray(out), np.asarray(ref_q),
                               rtol=2e-3, atol=2e-3)
    # Looser sanity check vs the pure-f32 PyTorch-equivalent forward.
    ref_f32 = _reference_f32(x, w1, w2)
    np.testing.assert_allclose(np.asarray(out), np.asarray(ref_f32),
                               rtol=2e-2, atol=2e-2)
    print("KERNEL_OK")
</pallas_src>

<mosaic_0001>
module attributes {stable_mosaic.version = 11 : i64} {
  func.func @_roiconv_kernel(%arg0: i32, %arg1: memref<256x384xbf16, #tpu.memory_space<vmem>>, %arg2: memref<384x128xbf16, #tpu.memory_space<vmem>>, %arg3: memref<1152x128xbf16, #tpu.memory_space<vmem>>, %arg4: memref<256x128xf32, #tpu.memory_space<vmem>>) attributes {dimension_semantics = [#tpu.dimension_semantics<parallel>], iteration_bounds = array<i64: 2>, scalar_prefetch = 0 : i64, scratch_operands = 0 : i64, tpu.core_type = #tpu.core_type<tc>, window_params = [{transform_indices = @transform_0, window_bounds = array<i64: 256, 384>}, {pipeline_mode = #tpu.pipeline_mode<synchronous>, transform_indices = @transform_1, window_bounds = array<i64: 384, 128>}, {pipeline_mode = #tpu.pipeline_mode<synchronous>, transform_indices = @transform_2, window_bounds = array<i64: 1152, 128>}, {transform_indices = @transform_3, window_bounds = array<i64: 256, 128>}]} {
    %c0 = arith.constant 0 : index
    %c0_0 = arith.constant 0 : index
    %0 = vector.load %arg1[%c0, %c0_0] : memref<256x384xbf16, #tpu.memory_space<vmem>>, vector<256x384xbf16>
    %c0_1 = arith.constant 0 : index
    %c0_2 = arith.constant 0 : index
    %1 = vector.load %arg2[%c0_1, %c0_2] : memref<384x128xbf16, #tpu.memory_space<vmem>>, vector<384x128xbf16>
    %cst = arith.constant dense<0.000000e+00> : vector<256x128xf32>
    %2 = tpu.matmul %0, %1, %cst {dimension_numbers = #tpu.dot_dimension_numbers<[1], [0], [0], [1], [0, 0, 1, 1], [], []>} : vector<256x384xbf16>, vector<384x128xbf16>, vector<256x128xf32> -> vector<256x128xf32>
    %cst_3 = arith.constant 1.000000e-01 : f32
    %3 = vector.broadcast %cst_3 : f32 to vector<256x128xf32>
    %4 = arith.mulf %3, %2 : vector<256x128xf32>
    %5 = arith.maximumf %2, %4 : vector<256x128xf32>
    %c17_i32 = arith.constant 17 : i32
    %6 = tpu.dynamic_rotate %5 by %c17_i32 dim 0 : vector<256x128xf32>, i32 -> vector<256x128xf32>
    %7 = arith.truncf %6 : vector<256x128xf32> to vector<256x128xbf16>
    %c16_i32 = arith.constant 16 : i32
    %8 = tpu.dynamic_rotate %5 by %c16_i32 dim 0 : vector<256x128xf32>, i32 -> vector<256x128xf32>
    %9 = arith.truncf %8 : vector<256x128xf32> to vector<256x128xbf16>
    %c15_i32 = arith.constant 15 : i32
    %10 = tpu.dynamic_rotate %5 by %c15_i32 dim 0 : vector<256x128xf32>, i32 -> vector<256x128xf32>
    %11 = arith.truncf %10 : vector<256x128xf32> to vector<256x128xbf16>
    %c1_i32 = arith.constant 1 : i32
    %12 = tpu.dynamic_rotate %5 by %c1_i32 dim 0 : vector<256x128xf32>, i32 -> vector<256x128xf32>
    %13 = arith.truncf %12 : vector<256x128xf32> to vector<256x128xbf16>
    %14 = arith.truncf %5 : vector<256x128xf32> to vector<256x128xbf16>
    %c255_i32 = arith.constant 255 : i32
    %15 = tpu.dynamic_rotate %5 by %c255_i32 dim 0 : vector<256x128xf32>, i32 -> vector<256x128xf32>
    %16 = arith.truncf %15 : vector<256x128xf32> to vector<256x128xbf16>
    %c241_i32 = arith.constant 241 : i32
    %17 = tpu.dynamic_rotate %5 by %c241_i32 dim 0 : vector<256x128xf32>, i32 -> vector<256x128xf32>
    %18 = arith.truncf %17 : vector<256x128xf32> to vector<256x128xbf16>
    %c240_i32 = arith.constant 240 : i32
    %19 = tpu.dynamic_rotate %5 by %c240_i32 dim 0 : vector<256x128xf32>, i32 -> vector<256x128xf32>
    %20 = arith.truncf %19 : vector<256x128xf32> to vector<256x128xbf16>
    %c239_i32 = arith.constant 239 : i32
    %21 = tpu.dynamic_rotate %5 by %c239_i32 dim 0 : vector<256x128xf32>, i32 -> vector<256x128xf32>
    %22 = arith.truncf %21 : vector<256x128xf32> to vector<256x128xbf16>
    %23 = tpu.concatenate %7, %9, %11, %13, %14, %16, %18, %20, %22 in 1 : vector<256x128xbf16>, vector<256x128xbf16>, vector<256x128xbf16>, vector<256x128xbf16>, vector<256x128xbf16>, vector<256x128xbf16>, vector<256x128xbf16>, vector<256x128xbf16>, vector<256x128xbf16> -> vector<256x1152xbf16>
    %c0_4 = arith.constant 0 : index
    %c0_5 = arith.constant 0 : index
    %24 = vector.load %arg3[%c0_4, %c0_5] : memref<1152x128xbf16, #tpu.memory_space<vmem>>, vector<1152x128xbf16>
    %cst_6 = arith.constant dense<0.000000e+00> : vector<256x128xf32>
    %25 = tpu.matmul %23, %24, %cst_6 {dimension_numbers = #tpu.dot_dimension_numbers<[1], [0], [0], [1], [0, 0, 1, 1], [], []>} : vector<256x1152xbf16>, vector<1152x128xbf16>, vector<256x128xf32> -> vector<256x128xf32>
    %cst_7 = arith.constant 1.000000e-01 : f32
    %26 = vector.broadcast %cst_7 : f32 to vector<256x128xf32>
    %27 = arith.mulf %26, %25 : vector<256x128xf32>
    %28 = arith.maximumf %25, %27 : vector<256x128xf32>
    %c0_8 = arith.constant 0 : index
    %c0_9 = arith.constant 0 : index
    %29 = vector.load %arg4[%c0_8, %c0_9] : memref<256x128xf32, #tpu.memory_space<vmem>>, vector<256x128xf32>
    tpu.vector_store %arg4[%c0_8, %c0_9], %28 {strides = array<i32>} : memref<256x128xf32, #tpu.memory_space<vmem>>, vector<256x128xf32>,
    return
  }
  func.func @transform_0(%arg0: i32) -> (i32, i32) {
    %c0_i32 = arith.constant 0 : i32
    %c0_i32_0 = arith.constant 0 : i32
    return %arg0, %c0_i32 : i32, i32
  }
  func.func @transform_1(%arg0: i32) -> (i32, i32) {
    %c0_i32 = arith.constant 0 : i32
    %c0_i32_0 = arith.constant 0 : i32
    %c0_i32_1 = arith.constant 0 : i32
    return %c0_i32, %c0_i32_0 : i32, i32
  }
  func.func @transform_2(%arg0: i32) -> (i32, i32) {
    %c0_i32 = arith.constant 0 : i32
    %c0_i32_0 = arith.constant 0 : i32
    %c0_i32_1 = arith.constant 0 : i32
    return %c0_i32, %c0_i32_0 : i32, i32
  }
  func.func @transform_3(%arg0: i32) -> (i32, i32) {
    %c0_i32 = arith.constant 0 : i32
    %c0_i32_0 = arith.constant 0 : i32
    return %arg0, %c0_i32 : i32, i32
  }
}

</mosaic_0001>

<llo_original>
// kernel: lpr_classifier1_forward.1
$region0: #{lpr_classifier1_forward.1}
  #allocation0 [shape = 'u32[]', space=smem, size = 0x4, offset = 0x4, fixed_abs, tag = 'smem constant byte address 0x4 - core index']
  #allocation1 [shape = 'u32[144,128]{1,0:T(1,128)}', space=vmem, size = 0x12000, scoped, tag = 'internal scratch']
  %s0 = inlined_call_operand.vmem [shape: bf16[512,384], index: 0, kind: input, shape index: {}]
  %s1 = inlined_call_operand.vmem [shape: bf16[384,128], index: 1, kind: input, shape index: {}]
  %s2 = inlined_call_operand.vmem [shape: bf16[1152,128], index: 2, kind: input, shape index: {}]
  %s3 = inlined_call_operand.vmem [shape: f32[512,128], index: 3, kind: output, shape index: {}]
  %s4 = sld [smem:[#allocation0]]
  $region45: #{lpr_classifier1_forward.1} parent=0
    _
  %s6 = ssub.s32 1, %s4
  %s7 = scalar_select 0, %s6, %s4
  loop: start=0, step=1, limit=4
  $region2: #{lpr_classifier1_forward.1} parent=0 // loop_pre_header
    _
  $region3: #{lpr_classifier1_forward.1} parent=0 // loop_header
    %s9 = sphi 0, %s13
    %p10 = scmp.ge.s32.totalorder %s9, 4
    %s19 = sphi 0, %s21
    %s22 = sphi 0, %s19
    %s23 = sphi 0, %s22
    %s39 = sphi 0, %s23
    %s43 = sphi 0, %s43
    %s45 = sphi 0, %s43
    %s46 = sphi 0, %s45
    %s60 = sphi 0, %s46
    %s64 = sphi 0, %s64
    %s66 = sphi 0, %s64
    %s67 = sphi 0, %s66
    %s81 = sphi 0, %s67
    %s87 = sphi 0, %s89
    %s90 = sphi 0, %s87
    %s91 = sphi 0, %s90
    %s107 = sphi 0, %s91
  $region4: #{lpr_classifier1_forward.1} parent=0 // loop_header_branch
    %12 = sbr.rel (%p10) target = $region8
  $region5: #{lpr_classifier1_forward.1} parent=0 // loop_body
    %s14 = ssub.s32 %s9, 1
    %s15 = ssub.s32 %s9, 2
    %s16 = sadd.s32 %s9, 1
    %s17 = ssub.s32 %s9, %s16
    %p18 = scmp.eq.s32.totalorder %s17, 0
    %s20 = sadd.s32 %s19, 1
    %s21 = scalar_select %p18, %s19, %s20
    %p24 = pneg %p18
    %p25 = scmp.eq.s32.totalorder %s9, 1
    %p26 = por %p24, %p25
    %p27 = scmp.ne.s32.totalorder %s19, %s22
    %p28 = scmp.eq.s32.totalorder %s9, 0
    %p29 = por %p27, %p28
    %p30 = scmp.ne.s32.totalorder %s19, %s22
    %p31 = scmp.eq.s32.totalorder %s14, 1
    %p32 = por %p30, %p31
    %p33 = scmp.ne.s32.totalorder %s22, %s23
    %p34 = scmp.eq.s32.totalorder %s14, 0
    %p35 = por %p33, %p34
    %p36 = scmp.ne.s32.totalorder %s22, %s23
    %p37 = scmp.eq.s32.totalorder %s15, 1
    %p38 = por %p36, %p37
    %p40 = scmp.ne.s32.totalorder %s23, %s39
    %p41 = scmp.eq.s32.totalorder %s15, 0
    %p42 = por %p40, %p41
    %s44 = sadd.s32 %s43, 1
    %p47 = scmp.eq.s32.totalorder %s9, 1
    %p48 = scmp.ne.s32.totalorder %s43, %s45
    %p49 = scmp.eq.s32.totalorder %s9, 0
    %p50 = por %p48, %p49
    %p51 = scmp.ne.s32.totalorder %s43, %s45
    %p52 = scmp.eq.s32.totalorder %s14, 1
    %p53 = por %p51, %p52
    %p54 = scmp.ne.s32.totalorder %s45, %s46
    %p55 = scmp.eq.s32.totalorder %s14, 0
    %p56 = por %p54, %p55
    %p57 = scmp.ne.s32.totalorder %s45, %s46
    %p58 = scmp.eq.s32.totalorder %s15, 1
    %p59 = por %p57, %p58
    %p61 = scmp.ne.s32.totalorder %s46, %s60
    %p62 = scmp.eq.s32.totalorder %s15, 0
    %p63 = por %p61, %p62
    %s65 = sadd.s32 %s64, 1
    %p68 = scmp.eq.s32.totalorder %s9, 1
    %p69 = scmp.ne.s32.totalorder %s64, %s66
    %p70 = scmp.eq.s32.totalorder %s9, 0
    %p71 = por %p69, %p70
    %p72 = scmp.ne.s32.totalorder %s64, %s66
    %p73 = scmp.eq.s32.totalorder %s14, 1
    %p74 = por %p72, %p73
    %p75 = scmp.ne.s32.totalorder %s66, %s67
    %p76 = scmp.eq.s32.totalorder %s14, 0
    %p77 = por %p75, %p76
    %p78 = scmp.ne.s32.totalorder %s66, %s67
    %p79 = scmp.eq.s32.totalorder %s15, 1
    %p80 = por %p78, %p79
    %p82 = scmp.ne.s32.totalorder %s67, %s81
    %p83 = scmp.eq.s32.totalorder %s15, 0
    %p84 = por %p82, %p83
    %s85 = ssub.s32 %s9, %s16
    %p86 = scmp.eq.s32.totalorder %s85, 0
    %s88 = sadd.s32 %s87, 1
    %s89 = scalar_select %p86, %s87, %s88
    %p92 = pneg %p86
    %p93 = scmp.eq.s32.totalorder %s9, 1
    %p94 = por %p92, %p93
    %p95 = scmp.ne.s32.totalorder %s87, %s90
    %p96 = scmp.eq.s32.totalorder %s9, 0
    %p97 = por %p95, %p96
    %p98 = scmp.ne.s32.totalorder %s87, %s90
    %p99 = scmp.eq.s32.totalorder %s14, 1
    %p100 = por %p98, %p99
    %p101 = scmp.ne.s32.totalorder %s90, %s91
    %p102 = scmp.eq.s32.totalorder %s14, 0
    %p103 = por %p101, %p102
    %p104 = scmp.ne.s32.totalorder %s90, %s91
    %p105 = scmp.eq.s32.totalorder %s15, 1
    %p106 = por %p104, %p105
    %p108 = scmp.ne.s32.totalorder %s91, %s107
    %p109 = scmp.eq.s32.totalorder %s15, 0
    %p110 = por %p108, %p109
    %p111 = scmp.le.s32.totalorder 1, %s9
    %p112 = scmp.lt.s32.totalorder %s9, 3
    %p113 = pnand %p111, %p112
    %p114 = pneg %p113
    // Predicated region
    $region9: #{lpr_classifier1_forward.1} parent=5 // pred_check
      _
    $region10: #{lpr_classifier1_forward.1} parent=5 // pred_check_branch
      %116 = sbr.rel (%p113) target = $region12
    $region11: #{lpr_classifier1_forward.1} parent=5 // pred_region
      %s117 = ssub.s32 %s9, 1
      // Predicated region
      $region13: #{lpr_classifier1_forward.1} parent=11 // pred_check
        %p118 = pneg %p56
      $region14: #{lpr_classifier1_forward.1} parent=11 // pred_check_branch
        %120 = sbr.rel (%p118) target = $region16
      $region15: #{lpr_classifier1_forward.1} parent=11 // pred_region
        _
      $region16: #{lpr_classifier1_forward.1} parent=11 // pred_fallthru
        _
      // Predicated region
      $region17: #{lpr_classifier1_forward.1} parent=11 // pred_check
        %p121 = pneg %p77
      $region18: #{lpr_classifier1_forward.1} parent=11 // pred_check_branch
        %123 = sbr.rel (%p121) target = $region20
      $region19: #{lpr_classifier1_forward.1} parent=11 // pred_region
        _
      $region20: #{lpr_classifier1_forward.1} parent=11 // pred_fallthru
        _
    $region12: #{lpr_classifier1_forward.1} parent=5 // pred_fallthru
      _
    %p124 = scmp.lt.s32.totalorder %s9, 2
    // Predicated region
    $region21: #{lpr_classifier1_forward.1} parent=5 // pred_check
      %p125 = pneg %p124
    $region22: #{lpr_classifier1_forward.1} parent=5 // pred_check_branch
      %127 = sbr.rel (%p125) target = $region24
    $region23: #{lpr_classifier1_forward.1} parent=5 // pred_region
      // Predicated region
      $region25: #{lpr_classifier1_forward.1} parent=23 // pred_check
        %p128 = pneg %p29
      $region26: #{lpr_classifier1_forward.1} parent=23 // pred_check_branch
        %130 = sbr.rel (%p128) target = $region28
      $region27: #{lpr_classifier1_forward.1} parent=23 // pred_region
        %s131 = smul.u32 32, %s9
        %p132 = scmp.lt.s32.totalorder %s131, 63
        %s133 = scalar_select %p132, %s131, 63
        %s134 = smul.addr %s133, 3
        %s135 = smul.addr %s134, 4
        %s136 = scalar_lea.vmem %s0, %s135
        %s137 = smul.u32 32, %s9
      $region28: #{lpr_classifier1_forward.1} parent=23 // pred_fallthru
        _
    $region24: #{lpr_classifier1_forward.1} parent=5 // pred_fallthru
      _
    %p138 = scmp.le.s32.totalorder 1, %s9
    %p139 = scmp.lt.s32.totalorder %s9, 3
    %p140 = pnand %p138, %p139
    %p141 = pneg %p140
    // Predicated region
    $region29: #{lpr_classifier1_forward.1} parent=5 // pred_check
      _
    $region30: #{lpr_classifier1_forward.1} parent=5 // pred_check_branch
      %143 = sbr.rel (%p140) target = $region32
    $region31: #{lpr_classifier1_forward.1} parent=5 // pred_region
      %s144 = ssub.s32 %s9, 1
      %s145 = smul.u32 32, %s14
      %p146 = scmp.lt.s32.totalorder %s145, 63
      %s147 = scalar_select %p146, %s145, 63
      %s148 = smul.addr %s147, 3
      %s149 = smul.addr %s148, 4
      %s150 = scalar_lea.vmem %s0, %s149
      %p151 = pneg %p35
      %p152 = pneg %p32
      %p153 = pneg %p56
      %p154 = pneg %p53
      %p155 = pneg %p77
      %p156 = pneg %p74
      %p157 = pneg %p103
      %p158 = pneg %p100
      %s159 = smul.u32 32, %s14
      %p160 = scmp.lt.s32.totalorder %s159, 63
      %s161 = scalar_select %p160, %s159, 63
      %s162 = smul.addr %s161, 8
      %s163 = scalar_lea.vmem %s3, %s162
      %s164 = smul.u32 32, %s14
      %p165 = scmp.lt.s32.totalorder %s164, 63
      %s166 = scalar_select %p165, %s164, 63
      %s167 = smul.addr %s166, 3
      %s168 = smul.addr %s167, 4
      %s169 = scalar_lea.vmem %s0, %s168
      %s170 = smul.u32 32, %s14
      %s171 = smul.u32 32, %s14
      %p172 = scmp.lt.s32.totalorder %s171, 63
      %s173 = scalar_select %p172, %s171, 63
      %s174 = smul.addr %s173, 8
      %s175 = scalar_lea.vmem %s3, %s174
      %s176 = smul.u32 32, %s14
      %v178 = vld [vmem:[%s169] sm:$0xff]
      %v179 = vld [vmem:[%s169 + $0x8] sm:$0xf]
      %v180 = vld [vmem:[%s169 + $0xc] sm:$0xff]
      %v181 = vld [vmem:[%s169 + $0x14] sm:$0xf]
      %v182 = vld [vmem:[%s169 + $0x18] sm:$0xff]
      %v183 = vld [vmem:[%s169 + $0x20] sm:$0xf]
      %v184 = vld [vmem:[%s169 + $0x24] sm:$0xff]
      %v185 = vld [vmem:[%s169 + $0x2c] sm:$0xf]
      %v186 = vld [vmem:[%s169 + $0x30] sm:$0xff]
      %v187 = vld [vmem:[%s169 + $0x38] sm:$0xf]
      %v188 = vld [vmem:[%s169 + $0x3c] sm:$0xff]
      %v189 = vld [vmem:[%s169 + $0x44] sm:$0xf]
      %v190 = vld [vmem:[%s169 + $0x48] sm:$0xff]
      %v191 = vld [vmem:[%s169 + $0x50] sm:$0xf]
      %v192 = vld [vmem:[%s169 + $0x54] sm:$0xff]
      %v193 = vld [vmem:[%s169 + $0x5c] sm:$0xf]
      %v194 = vld [vmem:[%s169 + $0x60] sm:$0xff]
      %v195 = vld [vmem:[%s169 + $0x68] sm:$0xf]
      %v196 = vld [vmem:[%s169 + $0x6c] sm:$0xff]
      %v197 = vld [vmem:[%s169 + $0x74] sm:$0xf]
      %v198 = vld [vmem:[%s169 + $0x78] sm:$0xff]
      %v199 = vld [vmem:[%s169 + $0x80] sm:$0xf]
      %v200 = vld [vmem:[%s169 + $0x84] sm:$0xff]
      %v201 = vld [vmem:[%s169 + $0x8c] sm:$0xf]
      %v202 = vld [vmem:[%s169 + $0x90] sm:$0xff]
      %v203 = vld [vmem:[%s169 + $0x98] sm:$0xf]
      %v204 = vld [vmem:[%s169 + $0x9c] sm:$0xff]
      %v205 = vld [vmem:[%s169 + $0xa4] sm:$0xf]
      %v206 = vld [vmem:[%s169 + $0xa8] sm:$0xff]
      %v207 = vld [vmem:[%s169 + $0xb0] sm:$0xf]
      %v208 = vld [vmem:[%s169 + $0xb4] sm:$0xff]
      %v209 = vld [vmem:[%s169 + $0xbc] sm:$0xf]
      %v210 = vld [vmem:[%s169 + $0xc0] sm:$0xff]
      %v211 = vld [vmem:[%s169 + $0xc8] sm:$0xf]
      %v212 = vld [vmem:[%s169 + $0xcc] sm:$0xff]
      %v213 = vld [vmem:[%s169 + $0xd4] sm:$0xf]
      %v214 = vld [vmem:[%s169 + $0xd8] sm:$0xff]
      %v215 = vld [vmem:[%s169 + $0xe0] sm:$0xf]
      %v216 = vld [vmem:[%s169 + $0xe4] sm:$0xff]
      %v217 = vld [vmem:[%s169 + $0xec] sm:$0xf]
      %v218 = vld [vmem:[%s169 + $0xf0] sm:$0xff]
      %v219 = vld [vmem:[%s169 + $0xf8] sm:$0xf]
      %v220 = vld [vmem:[%s169 + $0xfc] sm:$0xff]
      %v221 = vld [vmem:[%s169 + $0x104] sm:$0xf]
      %v222 = vld [vmem:[%s169 + $0x108] sm:$0xff]
      %v223 = vld [vmem:[%s169 + $0x110] sm:$0xf]
      %v224 = vld [vmem:[%s169 + $0x114] sm:$0xff]
      %v225 = vld [vmem:[%s169 + $0x11c] sm:$0xf]
      %v226 = vld [vmem:[%s169 + $0x120] sm:$0xff]
      %v227 = vld [vmem:[%s169 + $0x128] sm:$0xf]
      %v228 = vld [vmem:[%s169 + $0x12c] sm:$0xff]
      %v229 = vld [vmem:[%s169 + $0x134] sm:$0xf]
      %v230 = vld [vmem:[%s169 + $0x138] sm:$0xff]
      %v231 = vld [vmem:[%s169 + $0x140] sm:$0xf]
      %v232 = vld [vmem:[%s169 + $0x144] sm:$0xff]
      %v233 = vld [vmem:[%s169 + $0x14c] sm:$0xf]
      %v234 = vld [vmem:[%s169 + $0x150] sm:$0xff]
      %v235 = vld [vmem:[%s169 + $0x158] sm:$0xf]
      %v236 = vld [vmem:[%s169 + $0x15c] sm:$0xff]
      %v237 = vld [vmem:[%s169 + $0x164] sm:$0xf]
      %v238 = vld [vmem:[%s169 + $0x168] sm:$0xff]
      %v239 = vld [vmem:[%s169 + $0x170] sm:$0xf]
      %v240 = vld [vmem:[%s169 + $0x174] sm:$0xff]
      %v241 = vld [vmem:[%s169 + $0x17c] sm:$0xf]
      %v242 = vld [vmem:[%s1] sm:$0xf]
      %v243 = vld [vmem:[%s1 + $0x4] sm:$0xf]
      %v244 = vld [vmem:[%s1 + $0x8] sm:$0xf]
      %v245 = vld [vmem:[%s1 + $0xc] sm:$0xf]
      %v246 = vld [vmem:[%s1 + $0x10] sm:$0xf]
      %v247 = vld [vmem:[%s1 + $0x14] sm:$0xf]
      %v248 = vld [vmem:[%s1 + $0x18] sm:$0xf]
      %v249 = vld [vmem:[%s1 + $0x1c] sm:$0xf]
      %v250 = vld [vmem:[%s1 + $0x20] sm:$0xf]
      %v251 = vld [vmem:[%s1 + $0x24] sm:$0xf]
      %v252 = vld [vmem:[%s1 + $0x28] sm:$0xf]
      %v253 = vld [vmem:[%s1 + $0x2c] sm:$0xf]
      %v254 = vld [vmem:[%s1 + $0x30] sm:$0xf]
      %v255 = vld [vmem:[%s1 + $0x34] sm:$0xf]
      %v256 = vld [vmem:[%s1 + $0x38] sm:$0xf]
      %v257 = vld [vmem:[%s1 + $0x3c] sm:$0xf]
      %v258 = vld [vmem:[%s1 + $0x40] sm:$0xf]
      %v259 = vld [vmem:[%s1 + $0x44] sm:$0xf]
      %v260 = vld [vmem:[%s1 + $0x48] sm:$0xf]
      %v261 = vld [vmem:[%s1 + $0x4c] sm:$0xf]
      %v262 = vld [vmem:[%s1 + $0x50] sm:$0xf]
      %v263 = vld [vmem:[%s1 + $0x54] sm:$0xf]
      %v264 = vld [vmem:[%s1 + $0x58] sm:$0xf]
      %v265 = vld [vmem:[%s1 + $0x5c] sm:$0xf]
      %v266 = vld [vmem:[%s1 + $0x60] sm:$0xf]
      %v267 = vld [vmem:[%s1 + $0x64] sm:$0xf]
      %v268 = vld [vmem:[%s1 + $0x68] sm:$0xf]
      %v269 = vld [vmem:[%s1 + $0x6c] sm:$0xf]
      %v270 = vld [vmem:[%s1 + $0x70] sm:$0xf]
      %v271 = vld [vmem:[%s1 + $0x74] sm:$0xf]
      %v272 = vld [vmem:[%s1 + $0x78] sm:$0xf]
      %v273 = vld [vmem:[%s1 + $0x7c] sm:$0xf]
      %v274 = vld [vmem:[%s1 + $0x80] sm:$0xf]
      %v275 = vld [vmem:[%s1 + $0x84] sm:$0xf]
      %v276 = vld [vmem:[%s1 + $0x88] sm:$0xf]
      %v277 = vld [vmem:[%s1 + $0x8c] sm:$0xf]
      %v278 = vld [vmem:[%s1 + $0x90] sm:$0xf]
      %v279 = vld [vmem:[%s1 + $0x94] sm:$0xf]
      %v280 = vld [vmem:[%s1 + $0x98] sm:$0xf]
      %v281 = vld [vmem:[%s1 + $0x9c] sm:$0xf]
      %v282 = vld [vmem:[%s1 + $0xa0] sm:$0xf]
      %v283 = vld [vmem:[%s1 + $0xa4] sm:$0xf]
      %v284 = vld [vmem:[%s1 + $0xa8] sm:$0xf]
      %v285 = vld [vmem:[%s1 + $0xac] sm:$0xf]
      %v286 = vld [vmem:[%s1 + $0xb0] sm:$0xf]
      %v287 = vld [vmem:[%s1 + $0xb4] sm:$0xf]
      %v288 = vld [vmem:[%s1 + $0xb8] sm:$0xf]
      %v289 = vld [vmem:[%s1 + $0xbc] sm:$0xf]
      %v354 = vunpack.c.l.b16 %v178
      %v355 = vunpack.c.h.b16 %v178
      %v356 = vunpack.c.l.b16 %v179
      %v357 = vunpack.c.l.b16 %v180
      %v358 = vunpack.c.h.b16 %v180
      %v359 = vunpack.c.l.b16 %v181
      %v360 = vunpack.c.l.b16 %v182
      %v361 = vunpack.c.h.b16 %v182
      %v362 = vunpack.c.l.b16 %v183
      %v363 = vunpack.c.l.b16 %v184
      %v364 = vunpack.c.h.b16 %v184
      %v365 = vunpack.c.l.b16 %v185
      %v366 = vunpack.c.l.b16 %v186
      %v367 = vunpack.c.h.b16 %v186
      %v368 = vunpack.c.l.b16 %v187
      %v369 = vunpack.c.l.b16 %v188
      %v370 = vunpack.c.h.b16 %v188
      %v371 = vunpack.c.l.b16 %v189
      %v372 = vunpack.c.l.b16 %v190
      %v373 = vunpack.c.h.b16 %v190
      %v374 = vunpack.c.l.b16 %v191
      %v375 = vunpack.c.l.b16 %v192
      %v376 = vunpack.c.h.b16 %v192
      %v377 = vunpack.c.l.b16 %v193
      %v378 = vunpack.c.l.b16 %v194
      %v379 = vunpack.c.h.b16 %v194
      %v380 = vunpack.c.l.b16 %v195
      %v381 = vunpack.c.l.b16 %v196
      %v382 = vunpack.c.h.b16 %v196
      %v383 = vunpack.c.l.b16 %v197
      %v384 = vunpack.c.l.b16 %v198
      %v385 = vunpack.c.h.b16 %v198
      %v386 = vunpack.c.l.b16 %v199
      %v387 = vunpack.c.l.b16 %v200
      %v388 = vunpack.c.h.b16 %v200
      %v389 = vunpack.c.l.b16 %v201
      %v390 = vunpack.c.l.b16 %v202
      %v391 = vunpack.c.h.b16 %v202
      %v392 = vunpack.c.l.b16 %v203
      %v393 = vunpack.c.l.b16 %v204
      %v394 = vunpack.c.h.b16 %v204
      %v395 = vunpack.c.l.b16 %v205
      %v396 = vunpack.c.l.b16 %v206
      %v397 = vunpack.c.h.b16 %v206
      %v398 = vunpack.c.l.b16 %v207
      %v399 = vunpack.c.l.b16 %v208
      %v400 = vunpack.c.h.b16 %v208
      %v401 = vunpack.c.l.b16 %v209
      %v402 = vunpack.c.l.b16 %v210
      %v403 = vunpack.c.h.b16 %v210
      %v404 = vunpack.c.l.b16 %v211
      %v405 = vunpack.c.l.b16 %v212
      %v406 = vunpack.c.h.b16 %v212
      %v407 = vunpack.c.l.b16 %v213
      %v408 = vunpack.c.l.b16 %v214
      %v409 = vunpack.c.h.b16 %v214
      %v410 = vunpack.c.l.b16 %v215
      %v411 = vunpack.c.l.b16 %v216
      %v412 = vunpack.c.h.b16 %v216
      %v413 = vunpack.c.l.b16 %v217
      %v414 = vunpack.c.l.b16 %v218
      %v415 = vunpack.c.h.b16 %v218
      %v416 = vunpack.c.l.b16 %v219
      %v417 = vunpack.c.l.b16 %v220
      %v418 = vunpack.c.h.b16 %v220
      %v419 = vunpack.c.l.b16 %v221
      %v420 = vunpack.c.l.b16 %v222
      %v421 = vunpack.c.h.b16 %v222
      %v422 = vunpack.c.l.b16 %v223
      %v423 = vunpack.c.l.b16 %v224
      %v424 = vunpack.c.h.b16 %v224
      %v425 = vunpack.c.l.b16 %v225
      %v426 = vunpack.c.l.b16 %v226
      %v427 = vunpack.c.h.b16 %v226
      %v428 = vunpack.c.l.b16 %v227
      %v429 = vunpack.c.l.b16 %v228
      %v430 = vunpack.c.h.b16 %v228
      %v431 = vunpack.c.l.b16 %v229
      %v432 = vunpack.c.l.b16 %v230
      %v433 = vunpack.c.h.b16 %v230
      %v434 = vunpack.c.l.b16 %v231
      %v435 = vunpack.c.l.b16 %v232
      %v436 = vunpack.c.h.b16 %v232
      %v437 = vunpack.c.l.b16 %v233
      %v438 = vunpack.c.l.b16 %v234
      %v439 = vunpack.c.h.b16 %v234
      %v440 = vunpack.c.l.b16 %v235
      %v441 = vunpack.c.l.b16 %v236
      %v442 = vunpack.c.h.b16 %v236
      %v443 = vunpack.c.l.b16 %v237
      %v444 = vunpack.c.l.b16 %v238
      %v445 = vunpack.c.h.b16 %v238
      %v446 = vunpack.c.l.b16 %v239
      %v447 = vunpack.c.l.b16 %v240
      %v448 = vunpack.c.h.b16 %v240
      %v449 = vunpack.c.l.b16 %v241
      %v450 = vpack.c.b16 %v357, %v354
      %v451 = vpack.c.b16 %v358, %v355
      %v452 = vpack.c.b16 %v359, %v356
      %v453 = vpack.c.b16 %v363, %v360
      %v454 = vpack.c.b16 %v364, %v361
      %v455 = vpack.c.b16 %v365, %v362
      %v456 = vpack.c.b16 %v369, %v366
      %v457 = vpack.c.b16 %v370, %v367
      %v458 = vpack.c.b16 %v371, %v368
      %v459 = vpack.c.b16 %v375, %v372
      %v460 = vpack.c.b16 %v376, %v373
      %v461 = vpack.c.b16 %v377, %v374
      %v462 = vpack.c.b16 %v381, %v378
      %v463 = vpack.c.b16 %v382, %v379
      %v464 = vpack.c.b16 %v383, %v380
      %v465 = vpack.c.b16 %v387, %v384
      %v466 = vpack.c.b16 %v388, %v385
      %v467 = vpack.c.b16 %v389, %v386
      %v468 = vpack.c.b16 %v393, %v390
      %v469 = vpack.c.b16 %v394, %v391
      %v470 = vpack.c.b16 %v395, %v392
      %v471 = vpack.c.b16 %v399, %v396
      %v472 = vpack.c.b16 %v400, %v397
      %v473 = vpack.c.b16 %v401, %v398
      %v474 = vpack.c.b16 %v405, %v402
      %v475 = vpack.c.b16 %v406, %v403
      %v476 = vpack.c.b16 %v407, %v404
      %v477 = vpack.c.b16 %v411, %v408
      %v478 = vpack.c.b16 %v412, %v409
      %v479 = vpack.c.b16 %v413, %v410
      %v480 = vpack.c.b16 %v417, %v414
      %v481 = vpack.c.b16 %v418, %v415
      %v482 = vpack.c.b16 %v419, %v416
      %v483 = vpack.c.b16 %v423, %v420
      %v484 = vpack.c.b16 %v424, %v421
      %v485 = vpack.c.b16 %v425, %v422
      %v486 = vpack.c.b16 %v429, %v426
      %v487 = vpack.c.b16 %v430, %v427
      %v488 = vpack.c.b16 %v431, %v428
      %v489 = vpack.c.b16 %v435, %v432
      %v490 = vpack.c.b16 %v436, %v433
      %v491 = vpack.c.b16 %v437, %v434
      %v492 = vpack.c.b16 %v441, %v438
      %v493 = vpack.c.b16 %v442, %v439
      %v494 = vpack.c.b16 %v443, %v440
      %v495 = vpack.c.b16 %v447, %v444
      %v496 = vpack.c.b16 %v448, %v445
      %v497 = vpack.c.b16 %v449, %v446
      %v594 = vunpack.c.l.b16 %v242
      %v595 = vunpack.c.l.b16 %v243
      %v596 = vunpack.c.l.b16 %v244
      %v597 = vunpack.c.l.b16 %v245
      %v598 = vunpack.c.l.b16 %v246
      %v599 = vunpack.c.l.b16 %v247
      %v600 = vunpack.c.l.b16 %v248
      %v601 = vunpack.c.l.b16 %v249
      %v602 = vunpack.c.l.b16 %v250
      %v603 = vunpack.c.l.b16 %v251
      %v604 = vunpack.c.l.b16 %v252
      %v605 = vunpack.c.l.b16 %v253
      %v606 = vunpack.c.l.b16 %v254
      %v607 = vunpack.c.l.b16 %v255
      %v608 = vunpack.c.l.b16 %v256
      %v609 = vunpack.c.l.b16 %v257
      %v610 = vunpack.c.l.b16 %v258
      %v611 = vunpack.c.l.b16 %v259
      %v612 = vunpack.c.l.b16 %v260
      %v613 = vunpack.c.l.b16 %v261
      %v614 = vunpack.c.l.b16 %v262
      %v615 = vunpack.c.l.b16 %v263
      %v616 = vunpack.c.l.b16 %v264
      %v617 = vunpack.c.l.b16 %v265
      %v618 = vunpack.c.l.b16 %v266
      %v619 = vunpack.c.l.b16 %v267
      %v620 = vunpack.c.l.b16 %v268
      %v621 = vunpack.c.l.b16 %v269
      %v622 = vunpack.c.l.b16 %v270
      %v623 = vunpack.c.l.b16 %v271
      %v624 = vunpack.c.l.b16 %v272
      %v625 = vunpack.c.l.b16 %v273
      %v626 = vunpack.c.l.b16 %v274
      %v627 = vunpack.c.l.b16 %v275
      %v628 = vunpack.c.l.b16 %v276
      %v629 = vunpack.c.l.b16 %v277
      %v630 = vunpack.c.l.b16 %v278
      %v631 = vunpack.c.l.b16 %v279
      %v632 = vunpack.c.l.b16 %v280
      %v633 = vunpack.c.l.b16 %v281
      %v634 = vunpack.c.l.b16 %v282
      %v635 = vunpack.c.l.b16 %v283
      %v636 = vunpack.c.l.b16 %v284
      %v637 = vunpack.c.l.b16 %v285
      %v638 = vunpack.c.l.b16 %v286
      %v639 = vunpack.c.l.b16 %v287
      %v640 = vunpack.c.l.b16 %v288
      %v641 = vunpack.c.l.b16 %v289
      %v642 = vpack.c.b16 %v595, %v594
      %v643 = vpack.c.b16 %v597, %v596
      %v644 = vpack.c.b16 %v599, %v598
      %v645 = vpack.c.b16 %v601, %v600
      %v646 = vpack.c.b16 %v603, %v602
      %v647 = vpack.c.b16 %v605, %v604
      %v648 = vpack.c.b16 %v607, %v606
      %v649 = vpack.c.b16 %v609, %v608
      %v650 = vpack.c.b16 %v611, %v610
      %v651 = vpack.c.b16 %v613, %v612
      %v652 = vpack.c.b16 %v615, %v614
      %v653 = vpack.c.b16 %v617, %v616
      %v654 = vpack.c.b16 %v619, %v618
      %v655 = vpack.c.b16 %v621, %v620
      %v656 = vpack.c.b16 %v623, %v622
      %v657 = vpack.c.b16 %v625, %v624
      %v658 = vpack.c.b16 %v627, %v626
      %v659 = vpack.c.b16 %v629, %v628
      %v660 = vpack.c.b16 %v631, %v630
      %v661 = vpack.c.b16 %v633, %v632
      %v662 = vpack.c.b16 %v635, %v634
      %v663 = vpack.c.b16 %v637, %v636
      %v664 = vpack.c.b16 %v639, %v638
      %v665 = vpack.c.b16 %v641, %v640
      %690 = vmatprep.subr.bf16.mxu0 0
      %691 = vmatpush1.bf16.msra.mxu0 %v642
      %692 = vmatprep.subr.bf16.mxu0 0
      %693 = vmatpush1.bf16.msra.mxu0 %v643
      %694 = vmatprep.subr.bf16.mxu0 0
      %695 = vmatpush1.bf16.msra.mxu0 %v644
      %696 = vmatprep.subr.bf16.mxu0 0
      %697 = vmatpush1.bf16.msra.mxu0 %v645
      %698 = vmatprep.subr.bf16.mxu0 0
      %699 = vmatpush1.bf16.msra.mxu0 %v646
      %700 = vmatprep.subr.bf16.mxu0 0
      %701 = vmatpush1.bf16.msra.mxu0 %v647
      %702 = vmatprep.subr.bf16.mxu0 0
      %703 = vmatpush1.bf16.msra.mxu0 %v648
      %704 = vmatprep.subr.bf16.mxu0 0
      %705 = vmatpush1.bf16.msra.mxu0 %v649
      %706 = vmatprep.subr.bf16.mxu0 0
      %707 = vmatpush1.bf16.msra.mxu0 %v650
      %708 = vmatprep.subr.bf16.mxu0 0
      %709 = vmatpush1.bf16.msra.mxu0 %v651
      %710 = vmatprep.subr.bf16.mxu0 0
      %711 = vmatpush1.bf16.msra.mxu0 %v652
      %712 = vmatprep.subr.bf16.mxu0 0
      %713 = vmatpush1.bf16.msra.mxu0 %v653
      %714 = vmatprep.subr.bf16.mxu0 0
      %715 = vmatpush1.bf16.msra.mxu0 %v654
      %716 = vmatprep.subr.bf16.mxu0 0
      %717 = vmatpush1.bf16.msra.mxu0 %v655
      %718 = vmatprep.subr.bf16.mxu0 0
      %719 = vmatpush1.bf16.msra.mxu0 %v656
      %720 = vmatprep.subr.bf16.mxu0 0
      %721 = vmatpush1.bf16.msra.mxu0 %v657
      %722 = vmatprep.mubr.bf16.mxu0 %v451
      %723 = vmatmul.mubr.bf16.gmra.mrb[0].mxu0 %v450
      %v724 = vpop.f32.mrb[0].mxu0
      %v725 = vadd.f32 0.0, %v724
      %v726 = vpop.f32.mrb[0].mxu0
      %v727 = vpop.f32.mrb[0].mxu0
      %v728 = vadd.f32 0.0, %v727
      %v729 = vpop.f32.mrb[0].mxu0
      %730 = vmatprep.mubr.bf16.mxu0 %v454
      %731 = vmatmul.mubr.bf16.gmra.mrb[0].mxu0 %v453
      %v732 = vpop.f32.mrb[0].mxu0
      %v733 = vadd.f32 0.0, %v732
      %v734 = vpop.f32.mrb[0].mxu0
      %v735 = vpop.f32.mrb[0].mxu0
      %v736 = vadd.f32 0.0, %v735
      %v737 = vpop.f32.mrb[0].mxu0
      %738 = vmatprep.mubr.bf16.mxu0 %v457
      %739 = vmatmul.mubr.bf16.gmra.mrb[0].mxu0 %v456
      %v740 = vpop.f32.mrb[0].mxu0
      %v741 = vadd.f32 0.0, %v740
      %v742 = vpop.f32.mrb[0].mxu0
      %v743 = vpop.f32.mrb[0].mxu0
      %v744 = vadd.f32 0.0, %v743
      %v745 = vpop.f32.mrb[0].mxu0
      %746 = vmatprep.mubr.bf16.mxu0 %v460
      %747 = vmatmul.mubr.bf16.gmra.mrb[0].mxu0 %v459
      %v748 = vpop.f32.mrb[0].mxu0
      %v749 = vadd.f32 0.0, %v748
      %v750 = vpop.f32.mrb[0].mxu0
      %v751 = vpop.f32.mrb[0].mxu0
      %v752 = vadd.f32 0.0, %v751
      %v753 = vpop.f32.mrb[0].mxu0
      %754 = vmatprep.mubr.bf16.mxu0 %v463
      %755 = vmatmul.mubr.bf16.gmra.mrb[0].mxu0 %v462
      %v756 = vpop.f32.mrb[0].mxu0
      %v757 = vadd.f32 0.0, %v756
      %v758 = vpop.f32.mrb[0].mxu0
      %v759 = vpop.f32.mrb[0].mxu0
      %v760 = vadd.f32 0.0, %v759
      %v761 = vpop.f32.mrb[0].mxu0
      %762 = vmatprep.mubr.bf16.mxu0 %v466
      %763 = vmatmul.mubr.bf16.gmra.mrb[0].mxu0 %v465
      %v764 = vpop.f32.mrb[0].mxu0
      %v765 = vadd.f32 0.0, %v764
      %v766 = vpop.f32.mrb[0].mxu0
      %v767 = vpop.f32.mrb[0].mxu0
      %v768 = vadd.f32 0.0, %v767
      %v769 = vpop.f32.mrb[0].mxu0
      %770 = vmatprep.mubr.bf16.mxu0 %v469
      %771 = vmatmul.mubr.bf16.gmra.mrb[0].mxu0 %v468
      %v772 = vpop.f32.mrb[0].mxu0
      %v773 = vadd.f32 0.0, %v772
      %v774 = vpop.f32.mrb[0].mxu0
      %v775 = vpop.f32.mrb[0].mxu0
      %v776 = vadd.f32 0.0, %v775
      %v777 = vpop.f32.mrb[0].mxu0
      %778 = vmatprep.mubr.bf16.mxu0 %v472
      %779 = vmatmul.mubr.bf16.gmra.mrb[0].mxu0 %v471
      %v780 = vpop.f32.mrb[0].mxu0
      %v781 = vadd.f32 0.0, %v780
      %v782 = vpop.f32.mrb[0].mxu0
      %v783 = vpop.f32.mrb[0].mxu0
      %v784 = vadd.f32 0.0, %v783
      %v785 = vpop.f32.mrb[0].mxu0
      %786 = vmatprep.mubr.bf16.mxu0 %v475
      %787 = vmatmul.mubr.bf16.gmra.mrb[0].mxu0 %v474
      %v788 = vpop.f32.mrb[0].mxu0
      %v789 = vadd.f32 0.0, %v788
      %v790 = vpop.f32.mrb[0].mxu0
      %v791 = vpop.f32.mrb[0].mxu0
      %v792 = vadd.f32 0.0, %v791
      %v793 = vpop.f32.mrb[0].mxu0
      %794 = vmatprep.mubr.bf16.mxu0 %v478
      %795 = vmatmul.mubr.bf16.gmra.mrb[0].mxu0 %v477
      %v796 = vpop.f32.mrb[0].mxu0
      %v797 = vadd.f32 0.0, %v796
      %v798 = vpop.f32.mrb[0].mxu0
      %v799 = vpop.f32.mrb[0].mxu0
      %v800 = vadd.f32 0.0, %v799
      %v801 = vpop.f32.mrb[0].mxu0
      %802 = vmatprep.mubr.bf16.mxu0 %v481
      %803 = vmatmul.mubr.bf16.gmra.mrb[0].mxu0 %v480
      %v804 = vpop.f32.mrb[0].mxu0
      %v805 = vadd.f32 0.0, %v804
      %v806 = vpop.f32.mrb[0].mxu0
      %v807 = vpop.f32.mrb[0].mxu0
      %v808 = vadd.f32 0.0, %v807
      %v809 = vpop.f32.mrb[0].mxu0
      %810 = vmatprep.mubr.bf16.mxu0 %v484
      %811 = vmatmul.mubr.bf16.gmra.mrb[0].mxu0 %v483
      %v812 = vpop.f32.mrb[0].mxu0
      %v813 = vadd.f32 0.0, %v812
      %v814 = vpop.f32.mrb[0].mxu0
      %v815 = vpop.f32.mrb[0].mxu0
      %v816 = vadd.f32 0.0, %v815
      %v817 = vpop.f32.mrb[0].mxu0
      %818 = vmatprep.mubr.bf16.mxu0 %v487
      %819 = vmatmul.mubr.bf16.gmra.mrb[0].mxu0 %v486
      %v820 = vpop.f32.mrb[0].mxu0
      %v821 = vadd.f32 0.0, %v820
      %v822 = vpop.f32.mrb[0].mxu0
      %v823 = vpop.f32.mrb[0].mxu0
      %v824 = vadd.f32 0.0, %v823
      %v825 = vpop.f32.mrb[0].mxu0
      %826 = vmatprep.mubr.bf16.mxu0 %v490
      %827 = vmatmul.mubr.bf16.gmra.mrb[0].mxu0 %v489
      %v828 = vpop.f32.mrb[0].mxu0
      %v829 = vadd.f32 0.0, %v828
      %v830 = vpop.f32.mrb[0].mxu0
      %v831 = vpop.f32.mrb[0].mxu0
      %v832 = vadd.f32 0.0, %v831
      %v833 = vpop.f32.mrb[0].mxu0
      %834 = vmatprep.mubr.bf16.mxu0 %v493
      %835 = vmatmul.mubr.bf16.gmra.mrb[0].mxu0 %v492
      %v836 = vpop.f32.mrb[0].mxu0
      %v837 = vadd.f32 0.0, %v836
      %v838 = vpop.f32.mrb[0].mxu0
      %v839 = vpop.f32.mrb[0].mxu0
      %v840 = vadd.f32 0.0, %v839
      %v841 = vpop.f32.mrb[0].mxu0
      %842 = vmatprep.mubr.bf16.mxu0 %v496
      %843 = vmatmul.mubr.bf16.gmra.mrb[0].mxu0 %v495
      %v844 = vpop.f32.mrb[0].mxu0
      %v845 = vadd.f32 0.0, %v844
      %v846 = vpop.f32.mrb[0].mxu0
      %v847 = vpop.f32.mrb[0].mxu0
      %v848 = vadd.f32 0.0, %v847
      %v849 = vpop.f32.mrb[0].mxu0
      %850 = vdwg.mxu0
      %851 = vmatprep.subr.bf16.mxu0 0
      %852 = vmatpush1.bf16.msra.mxu0 %v658
      %853 = vmatprep.subr.bf16.mxu0 0
      %854 = vmatpush1.bf16.msra.mxu0 %v659
      %855 = vmatprep.subr.bf16.mxu0 0
      %856 = vmatpush1.bf16.msra.mxu0 %v660
      %857 = vmatprep.subr.bf16.mxu0 0
      %858 = vmatpush1.bf16.msra.mxu0 %v661
      %859 = vmatprep.subr.bf16.mxu0 0
      %860 = vmatpush1.bf16.msra.mxu0 %v662
      %861 = vmatprep.subr.bf16.mxu0 0
      %862 = vmatpush1.bf16.msra.mxu0 %v663
      %863 = vmatprep.subr.bf16.mxu0 0
      %864 = vmatpush1.bf16.msra.mxu0 %v664
      %865 = vmatprep.subr.bf16.mxu0 0
      %866 = vmatpush1.bf16.msra.mxu0 %v665
      %867 = vmatprep.subr.bf16.mxu0 0
      %868 = vmatpush1.bf16.msra.mxu0 0
      %869 = vmatprep.subr.bf16.mxu0 0
      %870 = vmatpush1.bf16.msra.mxu0 0
      %871 = vmatprep.subr.bf16.mxu0 0
      %872 = vmatpush1.bf16.msra.mxu0 0
      %873 = vmatprep.subr.bf16.mxu0 0
      %874 = vmatpush1.bf16.msra.mxu0 0
      %875 = vmatprep.subr.bf16.mxu0 0
      %876 = vmatpush1.bf16.msra.mxu0 0
      %877 = vmatprep.subr.bf16.mxu0 0
      %878 = vmatpush1.bf16.msra.mxu0 0
      %879 = vmatprep.subr.bf16.mxu0 0
      %880 = vmatpush1.bf16.msra.mxu0 0
      %881 = vmatprep.subr.bf16.mxu0 0
      %882 = vmatpush1.bf16.msra.mxu0 0
      %883 = vmatprep.mubr.bf16.mxu0 0
      %884 = vmatmul.mubr.bf16.gmra.mrb[0].mxu0 %v452
      %v885 = vpop.f32.mrb[0].mxu0
      %v886 = vadd.f32 %v725, %v885
      %v887 = vpop.f32.mrb[0].mxu0
      %v888 = vpop.f32.mrb[0].mxu0
      %v889 = vadd.f32 %v728, %v888
      %v890 = vpop.f32.mrb[0].mxu0
      %891 = vmatprep.mubr.bf16.mxu0 0
      %892 = vmatmul.mubr.bf16.gmra.mrb[0].mxu0 %v455
      %v893 = vpop.f32.mrb[0].mxu0
      %v894 = vadd.f32 %v733, %v893
      %v895 = vpop.f32.mrb[0].mxu0
      %v896 = vpop.f32.mrb[0].mxu0
      %v897 = vadd.f32 %v736, %v896
      %v898 = vpop.f32.mrb[0].mxu0
      %899 = vmatprep.mubr.bf16.mxu0 0
      %900 = vmatmul.mubr.bf16.gmra.mrb[0].mxu0 %v458
      %v901 = vpop.f32.mrb[0].mxu0
      %v902 = vadd.f32 %v741, %v901
      %v903 = vpop.f32.mrb[0].mxu0
      %v904 = vpop.f32.mrb[0].mxu0
      %v905 = vadd.f32 %v744, %v904
      %v906 = vpop.f32.mrb[0].mxu0
      %907 = vmatprep.mubr.bf16.mxu0 0
      %908 = vmatmul.mubr.bf16.gmra.mrb[0].mxu0 %v461
      %v909 = vpop.f32.mrb[0].mxu0
      %v910 = vadd.f32 %v749, %v909
      %v911 = vpop.f32.mrb[0].mxu0
      %v912 = vpop.f32.mrb[0].mxu0
      %v913 = vadd.f32 %v752, %v912
      %v914 = vpop.f32.mrb[0].mxu0
      %915 = vmatprep.mubr.bf16.mxu0 0
      %916 = vmatmul.mubr.bf16.gmra.mrb[0].mxu0 %v464
      %v917 = vpop.f32.mrb[0].mxu0
      %v918 = vadd.f32 %v757, %v917
      %v919 = vpop.f32.mrb[0].mxu0
      %v920 = vpop.f32.mrb[0].mxu0
      %v921 = vadd.f32 %v760, %v920
      %v922 = vpop.f32.mrb[0].mxu0
      %923 = vmatprep.mubr.bf16.mxu0 0
      %924 = vmatmul.mubr.bf16.gmra.mrb[0].mxu0 %v467
      %v925 = vpop.f32.mrb[0].mxu0
      %v926 = vadd.f32 %v765, %v925
      %v927 = vpop.f32.mrb[0].mxu0
      %v928 = vpop.f32.mrb[0].mxu0
      %v929 = vadd.f32 %v768, %v928
      %v930 = vpop.f32.mrb[0].mxu0
      %931 = vmatprep.mubr.bf16.mxu0 0
      %932 = vmatmul.mubr.bf16.gmra.mrb[0].mxu0 %v470
      %v933 = vpop.f32.mrb[0].mxu0
      %v934 = vadd.f32 %v773, %v933
      %v935 = vpop.f32.mrb[0].mxu0
      %v936 = vpop.f32.mrb[0].mxu0
      %v937 = vadd.f32 %v776, %v936
      %v938 = vpop.f32.mrb[0].mxu0
      %939 = vmatprep.mubr.bf16.mxu0 0
      %940 = vmatmul.mubr.bf16.gmra.mrb[0].mxu0 %v473
      %v941 = vpop.f32.mrb[0].mxu0
      %v942 = vadd.f32 %v781, %v941
      %v943 = vpop.f32.mrb[0].mxu0
      %v944 = vpop.f32.mrb[0].mxu0
      %v945 = vadd.f32 %v784, %v944
      %v946 = vpop.f32.mrb[0].mxu0
      %947 = vmatprep.mubr.bf16.mxu0 0
      %948 = vmatmul.mubr.bf16.gmra.mrb[0].mxu0 %v476
      %v949 = vpop.f32.mrb[0].mxu0
      %v950 = vadd.f32 %v789, %v949
      %v951 = vpop.f32.mrb[0].mxu0
      %v952 = vpop.f32.mrb[0].mxu0
      %v953 = vadd.f32 %v792, %v952
      %v954 = vpop.f32.mrb[0].mxu0
      %955 = vmatprep.mubr.bf16.mxu0 0
      %956 = vmatmul.mubr.bf16.gmra.mrb[0].mxu0 %v479
      %v957 = vpop.f32.mrb[0].mxu0
      %v958 = vadd.f32 %v797, %v957
      %v959 = vpop.f32.mrb[0].mxu0
      %v960 = vpop.f32.mrb[0].mxu0
      %v961 = vadd.f32 %v800, %v960
      %v962 = vpop.f32.mrb[0].mxu0
      %963 = vmatprep.mubr.bf16.mxu0 0
      %964 = vmatmul.mubr.bf16.gmra.mrb[0].mxu0 %v482
      %v965 = vpop.f32.mrb[0].mxu0
      %v966 = vadd.f32 %v805, %v965
      %v967 = vpop.f32.mrb[0].mxu0
      %v968 = vpop.f32.mrb[0].mxu0
      %v969 = vadd.f32 %v808, %v968
      %v970 = vpop.f32.mrb[0].mxu0
      %971 = vmatprep.mubr.bf16.mxu0 0
      %972 = vmatmul.mubr.bf16.gmra.mrb[0].mxu0 %v485
      %v973 = vpop.f32.mrb[0].mxu0
      %v974 = vadd.f32 %v813, %v973
      %v975 = vpop.f32.mrb[0].mxu0
      %v976 = vpop.f32.mrb[0].mxu0
      %v977 = vadd.f32 %v816, %v976
      %v978 = vpop.f32.mrb[0].mxu0
      %979 = vmatprep.mubr.bf16.mxu0 0
      %980 = vmatmul.mubr.bf16.gmra.mrb[0].mxu0 %v488
      %v981 = vpop.f32.mrb[0].mxu0
      %v982 = vadd.f32 %v821, %v981
      %v983 = vpop.f32.mrb[0].mxu0
      %v984 = vpop.f32.mrb[0].mxu0
      %v985 = vadd.f32 %v824, %v984
      %v986 = vpop.f32.mrb[0].mxu0
      %987 = vmatprep.mubr.bf16.mxu0 0
      %988 = vmatmul.mubr.bf16.gmra.mrb[0].mxu0 %v491
      %v989 = vpop.f32.mrb[0].mxu0
      %v990 = vadd.f32 %v829, %v989
      %v991 = vpop.f32.mrb[0].mxu0
      %v992 = vpop.f32.mrb[0].mxu0
      %v993 = vadd.f32 %v832, %v992
      %v994 = vpop.f32.mrb[0].mxu0
      %995 = vmatprep.mubr.bf16.mxu0 0
      %996 = vmatmul.mubr.bf16.gmra.mrb[0].mxu0 %v494
      %v997 = vpop.f32.mrb[0].mxu0
      %v998 = vadd.f32 %v837, %v997
      %v999 = vpop.f32.mrb[0].mxu0
      %v1000 = vpop.f32.mrb[0].mxu0
      %v1001 = vadd.f32 %v840, %v1000
      %v1002 = vpop.f32.mrb[0].mxu0
      %1003 = vmatprep.mubr.bf16.mxu0 0
      %1004 = vmatmul.mubr.bf16.gmra.mrb[0].mxu0 %v497
      %v1005 = vpop.f32.mrb[0].mxu0
      %v1006 = vadd.f32 %v845, %v1005
      %v1007 = vpop.f32.mrb[0].mxu0
      %v1008 = vpop.f32.mrb[0].mxu0
      %v1009 = vadd.f32 %v848, %v1008
      %v1010 = vpop.f32.mrb[0].mxu0
      %1011 = vdwg.mxu0
      %v1012 = vmul.f32 %v886, 0.1
      %v1013 = vmul.f32 %v889, 0.1
      %v1014 = vmul.f32 %v894, 0.1
      %v1015 = vmul.f32 %v897, 0.1
      %v1016 = vmul.f32 %v902, 0.1
      %v1017 = vmul.f32 %v905, 0.1
      %v1018 = vmul.f32 %v910, 0.1
      %v1019 = vmul.f32 %v913, 0.1
      %v1020 = vmul.f32 %v918, 0.1
      %v1021 = vmul.f32 %v921, 0.1
      %v1022 = vmul.f32 %v926, 0.1
      %v1023 = vmul.f32 %v929, 0.1
      %v1024 = vmul.f32 %v934, 0.1
      %v1025 = vmul.f32 %v937, 0.1
      %v1026 = vmul.f32 %v942, 0.1
      %v1027 = vmul.f32 %v945, 0.1
      %v1028 = vmul.f32 %v950, 0.1
      %v1029 = vmul.f32 %v953, 0.1
      %v1030 = vmul.f32 %v958, 0.1
      %v1031 = vmul.f32 %v961, 0.1
      %v1032 = vmul.f32 %v966, 0.1
      %v1033 = vmul.f32 %v969, 0.1
      %v1034 = vmul.f32 %v974, 0.1
      %v1035 = vmul.f32 %v977, 0.1
      %v1036 = vmul.f32 %v982, 0.1
      %v1037 = vmul.f32 %v985, 0.1
      %v1038 = vmul.f32 %v990, 0.1
      %v1039 = vmul.f32 %v993, 0.1
      %v1040 = vmul.f32 %v998, 0.1
      %v1041 = vmul.f32 %v1001, 0.1
      %v1042 = vmul.f32 %v1006, 0.1
      %v1043 = vmul.f32 %v1009, 0.1
      %v1044 = vmax.f32 %v886, %v1012
      %v1045 = vmax.f32 %v889, %v1013
      %v1046 = vmax.f32 %v894, %v1014
      %v1047 = vmax.f32 %v897, %v1015
      %v1048 = vmax.f32 %v902, %v1016
      %v1049 = vmax.f32 %v905, %v1017
      %v1050 = vmax.f32 %v910, %v1018
      %v1051 = vmax.f32 %v913, %v1019
      %v1052 = vmax.f32 %v918, %v1020
      %v1053 = vmax.f32 %v921, %v1021
      %v1054 = vmax.f32 %v926, %v1022
      %v1055 = vmax.f32 %v929, %v1023
      %v1056 = vmax.f32 %v934, %v1024
      %v1057 = vmax.f32 %v937, %v1025
      %v1058 = vmax.f32 %v942, %v1026
      %v1059 = vmax.f32 %v945, %v1027
      %v1060 = vmax.f32 %v950, %v1028
      %v1061 = vmax.f32 %v953, %v1029
      %v1062 = vmax.f32 %v958, %v1030
      %v1063 = vmax.f32 %v961, %v1031
      %v1064 = vmax.f32 %v966, %v1032
      %v1065 = vmax.f32 %v969, %v1033
      %v1066 = vmax.f32 %v974, %v1034
      %v1067 = vmax.f32 %v977, %v1035
      %v1068 = vmax.f32 %v982, %v1036
      %v1069 = vmax.f32 %v985, %v1037
      %v1070 = vmax.f32 %v990, %v1038
      %v1071 = vmax.f32 %v993, %v1039
      %v1072 = vmax.f32 %v998, %v1040
      %v1073 = vmax.f32 %v1001, %v1041
      %v1074 = vmax.f32 %v1006, %v1042
      %v1075 = vmax.f32 %v1009, %v1043
      %v1076 = vrot.slane %v1044, 7
      %v1077 = vrot.slane %v1045, 7
      %v1078 = vrot.slane %v1046, 7
      %v1079 = vrot.slane %v1047, 7
      %v1080 = vrot.slane %v1048, 7
      %v1081 = vrot.slane %v1049, 7
      %v1082 = vrot.slane %v1050, 7
      %v1083 = vrot.slane %v1051, 7
      %v1084 = vrot.slane %v1052, 7
      %v1085 = vrot.slane %v1053, 7
      %v1086 = vrot.slane %v1054, 7
      %v1087 = vrot.slane %v1055, 7
      %v1088 = vrot.slane %v1056, 7
      %v1089 = vrot.slane %v1057, 7
      %v1090 = vrot.slane %v1058, 7
      %v1091 = vrot.slane %v1059, 7
      %v1092 = vrot.slane %v1060, 7
      %v1093 = vrot.slane %v1061, 7
      %v1094 = vrot.slane %v1062, 7
      %v1095 = vrot.slane %v1063, 7
      %v1096 = vrot.slane %v1064, 7
      %v1097 = vrot.slane %v1065, 7
      %v1098 = vrot.slane %v1066, 7
      %v1099 = vrot.slane %v1067, 7
      %v1100 = vrot.slane %v1068, 7
      %v1101 = vrot.slane %v1069, 7
      %v1102 = vrot.slane %v1070, 7
      %v1103 = vrot.slane %v1071, 7
      %v1104 = vrot.slane %v1072, 7
      %v1105 = vrot.slane %v1073, 7
      %v1106 = vrot.slane %v1074, 7
      %v1107 = vrot.slane %v1075, 7
      %v1108 = vlaneseq
      %v1109 = vshrl.u32 %v1108, 7
      %vm1110 = vcmp.lt.s32.totalorder %v1109, 1
      %v1111 = vsel %vm1110, %v1106, %v1107
      %v1112 = vsel %vm1110, %v1105, %v1106
      %v1113 = vsel %vm1110, %v1104, %v1105
      %v1114 = vsel %vm1110, %v1103, %v1104
      %v1115 = vsel %vm1110, %v1102, %v1103
      %v1116 = vsel %vm1110, %v1101, %v1102
      %v1117 = vsel %vm1110, %v1100, %v1101
      %v1118 = vsel %vm1110, %v1099, %v1100
      %v1119 = vsel %vm1110, %v1098, %v1099
      %v1120 = vsel %vm1110, %v1097, %v1098
      %v1121 = vsel %vm1110, %v1096, %v1097
      %v1122 = vsel %vm1110, %v1095, %v1096
      %v1123 = vsel %vm1110, %v1094, %v1095
      %v1124 = vsel %vm1110, %v1093, %v1094
      %v1125 = vsel %vm1110, %v1092, %v1093
      %v1126 = vsel %vm1110, %v1091, %v1092
      %v1127 = vsel %vm1110, %v1090, %v1091
      %v1128 = vsel %vm1110, %v1089, %v1090
      %v1129 = vsel %vm1110, %v1088, %v1089
      %v1130 = vsel %vm1110, %v1087, %v1088
      %v1131 = vsel %vm1110, %v1086, %v1087
      %v1132 = vsel %vm1110, %v1085, %v1086
      %v1133 = vsel %vm1110, %v1084, %v1085
      %v1134 = vsel %vm1110, %v1083, %v1084
      %v1135 = vsel %vm1110, %v1082, %v1083
      %v1136 = vsel %vm1110, %v1081, %v1082
      %v1137 = vsel %vm1110, %v1080, %v1081
      %v1138 = vsel %vm1110, %v1079, %v1080
      %v1139 = vsel %vm1110, %v1078, %v1079
      %v1140 = vsel %vm1110, %v1077, %v1078
      %v1141 = vsel %vm1110, %v1076, %v1077
      %v1142 = vsel %vm1110, %v1107, %v1076
      %v1143 = vpack.c.bf16 %v1111, %v1112
      %v1144 = vpack.c.bf16 %v1141, %v1142
      %v1145 = vpack.c.bf16 %v1139, %v1140
      %v1146 = vpack.c.bf16 %v1137, %v1138
      %v1147 = vpack.c.bf16 %v1135, %v1136
      %v1148 = vpack.c.bf16 %v1133, %v1134
      %v1149 = vpack.c.bf16 %v1131, %v1132
      %v1150 = vpack.c.bf16 %v1129, %v1130
      %v1151 = vpack.c.bf16 %v1127, %v1128
      %v1152 = vpack.c.bf16 %v1125, %v1126
      %v1153 = vpack.c.bf16 %v1123, %v1124
      %v1154 = vpack.c.bf16 %v1121, %v1122
      %v1155 = vpack.c.bf16 %v1119, %v1120
      %v1156 = vpack.c.bf16 %v1117, %v1118
      %v1157 = vpack.c.bf16 %v1115, %v1116
      %v1158 = vpack.c.bf16 %v1113, %v1114
      %v1159 = vpack.c.bf16 %v1075, %v1074
      %v1160 = vpack.c.bf16 %v1045, %v1044
      %v1161 = vpack.c.bf16 %v1047, %v1046
      %v1162 = vpack.c.bf16 %v1049, %v1048
      %v1163 = vpack.c.bf16 %v1051, %v1050
      %v1164 = vpack.c.bf16 %v1053, %v1052
      %v1165 = vpack.c.bf16 %v1055, %v1054
      %v1166 = vpack.c.bf16 %v1057, %v1056
      %v1167 = vpack.c.bf16 %v1059, %v1058
      %v1168 = vpack.c.bf16 %v1061, %v1060
      %v1169 = vpack.c.bf16 %v1063, %v1062
      %v1170 = vpack.c.bf16 %v1065, %v1064
      %v1171 = vpack.c.bf16 %v1067, %v1066
      %v1172 = vpack.c.bf16 %v1069, %v1068
      %v1173 = vpack.c.bf16 %v1071, %v1070
      %v1174 = vpack.c.bf16 %v1073, %v1072
      %v1175 = vrot.slane %v1044, 1
      %v1176 = vrot.slane %v1045, 1
      %v1177 = vrot.slane %v1046, 1
      %v1178 = vrot.slane %v1047, 1
      %v1179 = vrot.slane %v1048, 1
      %v1180 = vrot.slane %v1049, 1
      %v1181 = vrot.slane %v1050, 1
      %v1182 = vrot.slane %v1051, 1
      %v1183 = vrot.slane %v1052, 1
      %v1184 = vrot.slane %v1053, 1
      %v1185 = vrot.slane %v1054, 1
      %v1186 = vrot.slane %v1055, 1
      %v1187 = vrot.slane %v1056, 1
      %v1188 = vrot.slane %v1057, 1
      %v1189 = vrot.slane %v1058, 1
      %v1190 = vrot.slane %v1059, 1
      %v1191 = vrot.slane %v1060, 1
      %v1192 = vrot.slane %v1061, 1
      %v1193 = vrot.slane %v1062, 1
      %v1194 = vrot.slane %v1063, 1
      %v1195 = vrot.slane %v1064, 1
      %v1196 = vrot.slane %v1065, 1
      %v1197 = vrot.slane %v1066, 1
      %v1198 = vrot.slane %v1067, 1
      %v1199 = vrot.slane %v1068, 1
      %v1200 = vrot.slane %v1069, 1
      %v1201 = vrot.slane %v1070, 1
      %v1202 = vrot.slane %v1071, 1
      %v1203 = vrot.slane %v1072, 1
      %v1204 = vrot.slane %v1073, 1
      %v1205 = vrot.slane %v1074, 1
      %v1206 = vrot.slane %v1075, 1
      %vm1207 = vcmp.lt.s32.totalorder %v1109, 7
      %v1208 = vsel %vm1207, %v1205, %v1206
      %v1209 = vsel %vm1207, %v1204, %v1205
      %v1210 = vsel %vm1207, %v1203, %v1204
      %v1211 = vsel %vm1207, %v1202, %v1203
      %v1212 = vsel %vm1207, %v1201, %v1202
      %v1213 = vsel %vm1207, %v1200, %v1201
      %v1214 = vsel %vm1207, %v1199, %v1200
      %v1215 = vsel %vm1207, %v1198, %v1199
      %v1216 = vsel %vm1207, %v1197, %v1198
      %v1217 = vsel %vm1207, %v1196, %v1197
      %v1218 = vsel %vm1207, %v1195, %v1196
      %v1219 = vsel %vm1207, %v1194, %v1195
      %v1220 = vsel %vm1207, %v1193, %v1194
      %v1221 = vsel %vm1207, %v1192, %v1193
      %v1222 = vsel %vm1207, %v1191, %v1192
      %v1223 = vsel %vm1207, %v1190, %v1191
      %v1224 = vsel %vm1207, %v1189, %v1190
      %v1225 = vsel %vm1207, %v1188, %v1189
      %v1226 = vsel %vm1207, %v1187, %v1188
      %v1227 = vsel %vm1207, %v1186, %v1187
      %v1228 = vsel %vm1207, %v1185, %v1186
      %v1229 = vsel %vm1207, %v1184, %v1185
      %v1230 = vsel %vm1207, %v1183, %v1184
      %v1231 = vsel %vm1207, %v1182, %v1183
      %v1232 = vsel %vm1207, %v1181, %v1182
      %v1233 = vsel %vm1207, %v1180, %v1181
      %v1234 = vsel %vm1207, %v1179, %v1180
      %v1235 = vsel %vm1207, %v1178, %v1179
      %v1236 = vsel %vm1207, %v1177, %v1178
      %v1237 = vsel %vm1207, %v1176, %v1177
      %v1238 = vsel %vm1207, %v1175, %v1176
      %v1239 = vsel %vm1207, %v1206, %v1175
      %v1240 = vpack.c.bf16 %v1239, %v1208
      %v1241 = vpack.c.bf16 %v1237, %v1238
      %v1242 = vpack.c.bf16 %v1235, %v1236
      %v1243 = vpack.c.bf16 %v1233, %v1234
      %v1244 = vpack.c.bf16 %v1231, %v1232
      %v1245 = vpack.c.bf16 %v1229, %v1230
      %v1246 = vpack.c.bf16 %v1227, %v1228
      %v1247 = vpack.c.bf16 %v1225, %v1226
      %v1248 = vpack.c.bf16 %v1223, %v1224
      %v1249 = vpack.c.bf16 %v1221, %v1222
      %v1250 = vpack.c.bf16 %v1219, %v1220
      %v1251 = vpack.c.bf16 %v1217, %v1218
      %v1252 = vpack.c.bf16 %v1215, %v1216
      %v1253 = vpack.c.bf16 %v1213, %v1214
      %v1254 = vpack.c.bf16 %v1211, %v1212
      %v1255 = vpack.c.bf16 %v1209, %v1210
      %v1256 = vld [vmem:[%s2] sm:$0xf]
      %v1257 = vld [vmem:[%s2 + $0x4] sm:$0xf]
      %v1258 = vld [vmem:[%s2 + $0x8] sm:$0xf]
      %v1259 = vld [vmem:[%s2 + $0xc] sm:$0xf]
      %v1260 = vld [vmem:[%s2 + $0x10] sm:$0xf]
      %v1261 = vld [vmem:[%s2 + $0x14] sm:$0xf]
      %v1262 = vld [vmem:[%s2 + $0x18] sm:$0xf]
      %v1263 = vld [vmem:[%s2 + $0x1c] sm:$0xf]
      %v1264 = vld [vmem:[%s2 + $0x20] sm:$0xf]
      %v1265 = vld [vmem:[%s2 + $0x24] sm:$0xf]
      %v1266 = vld [vmem:[%s2 + $0x28] sm:$0xf]
      %v1267 = vld [vmem:[%s2 + $0x2c] sm:$0xf]
      %v1268 = vld [vmem:[%s2 + $0x30] sm:$0xf]
      %v1269 = vld [vmem:[%s2 + $0x34] sm:$0xf]
      %v1270 = vld [vmem:[%s2 + $0x38] sm:$0xf]
      %v1271 = vld [vmem:[%s2 + $0x3c] sm:$0xf]
      %v1272 = vld [vmem:[%s2 + $0x40] sm:$0xf]
      %v1273 = vld [vmem:[%s2 + $0x44] sm:$0xf]
      %v1274 = vld [vmem:[%s2 + $0x48] sm:$0xf]
      %v1275 = vld [vmem:[%s2 + $0x4c] sm:$0xf]
      %v1276 = vld [vmem:[%s2 + $0x50] sm:$0xf]
      %v1277 = vld [vmem:[%s2 + $0x54] sm:$0xf]
      %v1278 = vld [vmem:[%s2 + $0x58] sm:$0xf]
      %v1279 = vld [vmem:[%s2 + $0x5c] sm:$0xf]
      %v1280 = vld [vmem:[%s2 + $0x60] sm:$0xf]
      %v1281 = vld [vmem:[%s2 + $0x64] sm:$0xf]
      %v1282 = vld [vmem:[%s2 + $0x68] sm:$0xf]
      %v1283 = vld [vmem:[%s2 + $0x6c] sm:$0xf]
      %v1284 = vld [vmem:[%s2 + $0x70] sm:$0xf]
      %v1285 = vld [vmem:[%s2 + $0x74] sm:$0xf]
      %v1286 = vld [vmem:[%s2 + $0x78] sm:$0xf]
      %v1287 = vld [vmem:[%s2 + $0x7c] sm:$0xf]
      %v1288 = vld [vmem:[%s2 + $0x80] sm:$0xf]
      %v1289 = vld [vmem:[%s2 + $0x84] sm:$0xf]
      %v1290 = vld [vmem:[%s2 + $0x88] sm:$0xf]
      %v1291 = vld [vmem:[%s2 + $0x8c] sm:$0xf]
      %v1292 = vld [vmem:[%s2 + $0x90] sm:$0xf]
      %v1293 = vld [vmem:[%s2 + $0x94] sm:$0xf]
      %v1294 = vld [vmem:[%s2 + $0x98] sm:$0xf]
      %v1295 = vld [vmem:[%s2 + $0x9c] sm:$0xf]
      %v1296 = vld [vmem:[%s2 + $0xa0] sm:$0xf]
      %v1297 = vld [vmem:[%s2 + $0xa4] sm:$0xf]
      %v1298 = vld [vmem:[%s2 + $0xa8] sm:$0xf]
      %v1299 = vld [vmem:[%s2 + $0xac] sm:$0xf]
      %v1300 = vld [vmem:[%s2 + $0xb0] sm:$0xf]
      %v1301 = vld [vmem:[%s2 + $0xb4] sm:$0xf]
      %v1302 = vld [vmem:[%s2 + $0xb8] sm:$0xf]
      %v1303 = vld [vmem:[%s2 + $0xbc] sm:$0xf]
      %v1304 = vld [vmem:[%s2 + $0xc0] sm:$0xf]
      %v1305 = vld [vmem:[%s2 + $0xc4] sm:$0xf]
      %v1306 = vld [vmem:[%s2 + $0xc8] sm:$0xf]
      %v1307 = vld [vmem:[%s2 + $0xcc] sm:$0xf]
      %v1308 = vld [vmem:[%s2 + $0xd0] sm:$0xf]
      %v1309 = vld [vmem:[%s2 + $0xd4] sm:$0xf]
      %v1310 = vld [vmem:[%s2 + $0xd8] sm:$0xf]
      %v1311 = vld [vmem:[%s2 + $0xdc] sm:$0xf]
      %v1312 = vld [vmem:[%s2 + $0xe0] sm:$0xf]
      %v1313 = vld [vmem:[%s2 + $0xe4] sm:$0xf]
      %v1314 = vld [vmem:[%s2 + $0xe8] sm:$0xf]
      %v1315 = vld [vmem:[%s2 + $0xec] sm:$0xf]
      %v1316 = vld [vmem:[%s2 + $0xf0] sm:$0xf]
      %v1317 = vld [vmem:[%s2 + $0xf4] sm:$0xf]
      %v1318 = vld [vmem:[%s2 + $0xf8] sm:$0xf]
      %v1319 = vld [vmem:[%s2 + $0xfc] sm:$0xf]
      %v1320 = vld [vmem:[%s2 + $0x100] sm:$0xf]
      %v1321 = vld [vmem:[%s2 + $0x104] sm:$0xf]
      %v1322 = vld [vmem:[%s2 + $0x108] sm:$0xf]
      %v1323 = vld [vmem:[%s2 + $0x10c] sm:$0xf]
      %v1324 = vld [vmem:[%s2 + $0x110] sm:$0xf]
      %v1325 = vld [vmem:[%s2 + $0x114] sm:$0xf]
      %v1326 = vld [vmem:[%s2 + $0x118] sm:$0xf]
      %v1327 = vld [vmem:[%s2 + $0x11c] sm:$0xf]
      %v1328 = vld [vmem:[%s2 + $0x120] sm:$0xf]
      %v1329 = vld [vmem:[%s2 + $0x124] sm:$0xf]
      %v1330 = vld [vmem:[%s2 + $0x128] sm:$0xf]
      %v1331 = vld [vmem:[%s2 + $0x12c] sm:$0xf]
      %v1332 = vld [vmem:[%s2 + $0x130] sm:$0xf]
      %v1333 = vld [vmem:[%s2 + $0x134] sm:$0xf]
      %v1334 = vld [vmem:[%s2 + $0x138] sm:$0xf]
      %v1335 = vld [vmem:[%s2 + $0x13c] sm:$0xf]
      %v1336 = vld [vmem:[%s2 + $0x140] sm:$0xf]
      %v1337 = vld [vmem:[%s2 + $0x144] sm:$0xf]
      %v1338 = vld [vmem:[%s2 + $0x148] sm:$0xf]
      %v1339 = vld [vmem:[%s2 + $0x14c] sm:$0xf]
      %v1340 = vld [vmem:[%s2 + $0x150] sm:$0xf]
      %v1341 = vld [vmem:[%s2 + $0x154] sm:$0xf]
      %v1342 = vld [vmem:[%s2 + $0x158] sm:$0xf]
      %v1343 = vld [vmem:[%s2 + $0x15c] sm:$0xf]
      %v1344 = vld [vmem:[%s2 + $0x160] sm:$0xf]
      %v1345 = vld [vmem:[%s2 + $0x164] sm:$0xf]
      %v1346 = vld [vmem:[%s2 + $0x168] sm:$0xf]
      %v1347 = vld [vmem:[%s2 + $0x16c] sm:$0xf]
      %v1348 = vld [vmem:[%s2 + $0x170] sm:$0xf]
      %v1349 = vld [vmem:[%s2 + $0x174] sm:$0xf]
      %v1350 = vld [vmem:[%s2 + $0x178] sm:$0xf]
      %v1351 = vld [vmem:[%s2 + $0x17c] sm:$0xf]
      %v1352 = vld [vmem:[%s2 + $0x180] sm:$0xf]
      %v1353 = vld [vmem:[%s2 + $0x184] sm:$0xf]
      %v1354 = vld [vmem:[%s2 + $0x188] sm:$0xf]
      %v1355 = vld [vmem:[%s2 + $0x18c] sm:$0xf]
      %v1356 = vld [vmem:[%s2 + $0x190] sm:$0xf]
      %v1357 = vld [vmem:[%s2 + $0x194] sm:$0xf]
      %v1358 = vld [vmem:[%s2 + $0x198] sm:$0xf]
      %v1359 = vld [vmem:[%s2 + $0x19c] sm:$0xf]
      %v1360 = vld [vmem:[%s2 + $0x1a0] sm:$0xf]
      %v1361 = vld [vmem:[%s2 + $0x1a4] sm:$0xf]
      %v1362 = vld [vmem:[%s2 + $0x1a8] sm:$0xf]
      %v1363 = vld [vmem:[%s2 + $0x1ac] sm:$0xf]
      %v1364 = vld [vmem:[%s2 + $0x1b0] sm:$0xf]
      %v1365 = vld [vmem:[%s2 + $0x1b4] sm:$0xf]
      %v1366 = vld [vmem:[%s2 + $0x1b8] sm:$0xf]
      %v1367 = vld [vmem:[%s2 + $0x1bc] sm:$0xf]
      %v1368 = vld [vmem:[%s2 + $0x1c0] sm:$0xf]
      %v1369 = vld [vmem:[%s2 + $0x1c4] sm:$0xf]
      %v1370 = vld [vmem:[%s2 + $0x1c8] sm:$0xf]
      %v1371 = vld [vmem:[%s2 + $0x1cc] sm:$0xf]
      %v1372 = vld [vmem:[%s2 + $0x1d0] sm:$0xf]
      %v1373 = vld [vmem:[%s2 + $0x1d4] sm:$0xf]
      %v1374 = vld [vmem:[%s2 + $0x1d8] sm:$0xf]
      %v1375 = vld [vmem:[%s2 + $0x1dc] sm:$0xf]
      %v1376 = vld [vmem:[%s2 + $0x1e0] sm:$0xf]
      %v1377 = vld [vmem:[%s2 + $0x1e4] sm:$0xf]
      %v1378 = vld [vmem:[%s2 + $0x1e8] sm:$0xf]
      %v1379 = vld [vmem:[%s2 + $0x1ec] sm:$0xf]
      %v1380 = vld [vmem:[%s2 + $0x1f0] sm:$0xf]
      %v1381 = vld [vmem:[%s2 + $0x1f4] sm:$0xf]
      %v1382 = vld [vmem:[%s2 + $0x1f8] sm:$0xf]
      %v1383 = vld [vmem:[%s2 + $0x1fc] sm:$0xf]
      %v1384 = vld [vmem:[%s2 + $0x200] sm:$0xf]
      %v1385 = vld [vmem:[%s2 + $0x204] sm:$0xf]
      %v1386 = vld [vmem:[%s2 + $0x208] sm:$0xf]
      %v1387 = vld [vmem:[%s2 + $0x20c] sm:$0xf]
      %v1388 = vld [vmem:[%s2 + $0x210] sm:$0xf]
      %v1389 = vld [vmem:[%s2 + $0x214] sm:$0xf]
      %v1390 = vld [vmem:[%s2 + $0x218] sm:$0xf]
      %v1391 = vld [vmem:[%s2 + $0x21c] sm:$0xf]
      %v1392 = vld [vmem:[%s2 + $0x220] sm:$0xf]
      %v1393 = vld [vmem:[%s2 + $0x224] sm:$0xf]
      %v1394 = vld [vmem:[%s2 + $0x228] sm:$0xf]
      %v1395 = vld [vmem:[%s2 + $0x22c] sm:$0xf]
      %v1396 = vld [vmem:[%s2 + $0x230] sm:$0xf]
      %v1397 = vld [vmem:[%s2 + $0x234] sm:$0xf]
      %v1398 = vld [vmem:[%s2 + $0x238] sm:$0xf]
      %v1399 = vld [vmem:[%s2 + $0x23c] sm:$0xf]
      %v1544 = vunpack.c.l.b16 %v1256
      %v1545 = vunpack.c.l.b16 %v1257
      %v1546 = vunpack.c.l.b16 %v1258
      %v1547 = vunpack.c.l.b16 %v1259
      %v1548 = vunpack.c.l.b16 %v1260
      %v1549 = vunpack.c.l.b16 %v1261
      %v1550 = vunpack.c.l.b16 %v1262
      %v1551 = vunpack.c.l.b16 %v1263
      %v1552 = vunpack.c.l.b16 %v1264
      %v1553 = vunpack.c.l.b16 %v1265
      %v1554 = vunpack.c.l.b16 %v1266
      %v1555 = vunpack.c.l.b16 %v1267
      %v1556 = vunpack.c.l.b16 %v1268
      %v1557 = vunpack.c.l.b16 %v1269
      %v1558 = vunpack.c.l.b16 %v1270
      %v1559 = vunpack.c.l.b16 %v1271
      %v1560 = vunpack.c.l.b16 %v1272
      %v1561 = vunpack.c.l.b16 %v1273
      %v1562 = vunpack.c.l.b16 %v1274
      %v1563 = vunpack.c.l.b16 %v1275
      %v1564 = vunpack.c.l.b16 %v1276
      %v1565 = vunpack.c.l.b16 %v1277
      %v1566 = vunpack.c.l.b16 %v1278
      %v1567 = vunpack.c.l.b16 %v1279
      %v1568 = vunpack.c.l.b16 %v1280
      %v1569 = vunpack.c.l.b16 %v1281
      %v1570 = vunpack.c.l.b16 %v1282
      %v1571 = vunpack.c.l.b16 %v1283
      %v1572 = vunpack.c.l.b16 %v1284
      %v1573 = vunpack.c.l.b16 %v1285
      %v1574 = vunpack.c.l.b16 %v1286
      %v1575 = vunpack.c.l.b16 %v1287
      %v1576 = vunpack.c.l.b16 %v1288
      %v1577 = vunpack.c.l.b16 %v1289
      %v1578 = vunpack.c.l.b16 %v1290
      %v1579 = vunpack.c.l.b16 %v1291
      %v1580 = vunpack.c.l.b16 %v1292
      %v1581 = vunpack.c.l.b16 %v1293
      %v1582 = vunpack.c.l.b16 %v1294
      %v1583 = vunpack.c.l.b16 %v1295
      %v1584 = vunpack.c.l.b16 %v1296
      %v1585 = vunpack.c.l.b16 %v1297
      %v1586 = vunpack.c.l.b16 %v1298
      %v1587 = vunpack.c.l.b16 %v1299
      %v1588 = vunpack.c.l.b16 %v1300
      %v1589 = vunpack.c.l.b16 %v1301
      %v1590 = vunpack.c.l.b16 %v1302
      %v1591 = vunpack.c.l.b16 %v1303
      %v1592 = vunpack.c.l.b16 %v1304
      %v1593 = vunpack.c.l.b16 %v1305
      %v1594 = vunpack.c.l.b16 %v1306
      %v1595 = vunpack.c.l.b16 %v1307
      %v1596 = vunpack.c.l.b16 %v1308
      %v1597 = vunpack.c.l.b16 %v1309
      %v1598 = vunpack.c.l.b16 %v1310
      %v1599 = vunpack.c.l.b16 %v1311
      %v1600 = vunpack.c.l.b16 %v1312
      %v1601 = vunpack.c.l.b16 %v1313
      %v1602 = vunpack.c.l.b16 %v1314
      %v1603 = vunpack.c.l.b16 %v1315
      %v1604 = vunpack.c.l.b16 %v1316
      %v1605 = vunpack.c.l.b16 %v1317
      %v1606 = vunpack.c.l.b16 %v1318
      %v1607 = vunpack.c.l.b16 %v1319
      %v1608 = vunpack.c.l.b16 %v1320
      %v1609 = vunpack.c.l.b16 %v1321
      %v1610 = vunpack.c.l.b16 %v1322
      %v1611 = vunpack.c.l.b16 %v1323
      %v1612 = vunpack.c.l.b16 %v1324
      %v1613 = vunpack.c.l.b16 %v1325
      %v1614 = vunpack.c.l.b16 %v1326
      %v1615 = vunpack.c.l.b16 %v1327
      %v1616 = vunpack.c.l.b16 %v1328
      %v1617 = vunpack.c.l.b16 %v1329
      %v1618 = vunpack.c.l.b16 %v1330
      %v1619 = vunpack.c.l.b16 %v1331
      %v1620 = vunpack.c.l.b16 %v1332
      %v1621 = vunpack.c.l.b16 %v1333
      %v1622 = vunpack.c.l.b16 %v1334
      %v1623 = vunpack.c.l.b16 %v1335
      %v1624 = vunpack.c.l.b16 %v1336
      %v1625 = vunpack.c.l.b16 %v1337
      %v1626 = vunpack.c.l.b16 %v1338
      %v1627 = vunpack.c.l.b16 %v1339
      %v1628 = vunpack.c.l.b16 %v1340
      %v1629 = vunpack.c.l.b16 %v1341
      %v1630 = vunpack.c.l.b16 %v1342
      %v1631 = vunpack.c.l.b16 %v1343
      %v1632 = vunpack.c.l.b16 %v1344
      %v1633 = vunpack.c.l.b16 %v1345
      %v1634 = vunpack.c.l.b16 %v1346
      %v1635 = vunpack.c.l.b16 %v1347
      %v1636 = vunpack.c.l.b16 %v1348
      %v1637 = vunpack.c.l.b16 %v1349
      %v1638 = vunpack.c.l.b16 %v1350
      %v1639 = vunpack.c.l.b16 %v1351
      %v1640 = vunpack.c.l.b16 %v1352
      %v1641 = vunpack.c.l.b16 %v1353
      %v1642 = vunpack.c.l.b16 %v1354
      %v1643 = vunpack.c.l.b16 %v1355
      %v1644 = vunpack.c.l.b16 %v1356
      %v1645 = vunpack.c.l.b16 %v1357
      %v1646 = vunpack.c.l.b16 %v1358
      %v1647 = vunpack.c.l.b16 %v1359
      %v1648 = vunpack.c.l.b16 %v1360
      %v1649 = vunpack.c.l.b16 %v1361
      %v1650 = vunpack.c.l.b16 %v1362
      %v1651 = vunpack.c.l.b16 %v1363
      %v1652 = vunpack.c.l.b16 %v1364
      %v1653 = vunpack.c.l.b16 %v1365
      %v1654 = vunpack.c.l.b16 %v1366
      %v1655 = vunpack.c.l.b16 %v1367
      %v1656 = vunpack.c.l.b16 %v1368
      %v1657 = vunpack.c.l.b16 %v1369
      %v1658 = vunpack.c.l.b16 %v1370
      %v1659 = vunpack.c.l.b16 %v1371
      %v1660 = vunpack.c.l.b16 %v1372
      %v1661 = vunpack.c.l.b16 %v1373
      %v1662 = vunpack.c.l.b16 %v1374
      %v1663 = vunpack.c.l.b16 %v1375
      %v1664 = vunpack.c.l.b16 %v1376
      %v1665 = vunpack.c.l.b16 %v1377
      %v1666 = vunpack.c.l.b16 %v1378
      %v1667 = vunpack.c.l.b16 %v1379
      %v1668 = vunpack.c.l.b16 %v1380
      %v1669 = vunpack.c.l.b16 %v1381
      %v1670 = vunpack.c.l.b16 %v1382
      %v1671 = vunpack.c.l.b16 %v1383
      %v1672 = vunpack.c.l.b16 %v1384
      %v1673 = vunpack.c.l.b16 %v1385
      %v1674 = vunpack.c.l.b16 %v1386
      %v1675 = vunpack.c.l.b16 %v1387
      %v1676 = vunpack.c.l.b16 %v1388
      %v1677 = vunpack.c.l.b16 %v1389
      %v1678 = vunpack.c.l.b16 %v1390
      %v1679 = vunpack.c.l.b16 %v1391
      %v1680 = vunpack.c.l.b16 %v1392
      %v1681 = vunpack.c.l.b16 %v1393
      %v1682 = vunpack.c.l.b16 %v1394
      %v1683 = vunpack.c.l.b16 %v1395
      %v1684 = vunpack.c.l.b16 %v1396
      %v1685 = vunpack.c.l.b16 %v1397
      %v1686 = vunpack.c.l.b16 %v1398
      %v1687 = vunpack.c.l.b16 %v1399
      %v1688 = vpack.c.b16 %v1545, %v1544
      %v1689 = vpack.c.b16 %v1547, %v1546
      %v1690 = vpack.c.b16 %v1549, %v1548
      %v1691 = vpack.c.b16 %v1551, %v1550
      %v1692 = vpack.c.b16 %v1553, %v1552
      %v1693 = vpack.c.b16 %v1555, %v1554
      %v1694 = vpack.c.b16 %v1557, %v1556
      %v1695 = vpack.c.b16 %v1559, %v1558
      %v1696 = vpack.c.b16 %v1561, %v1560
      %v1697 = vpack.c.b16 %v1563, %v1562
      %v1698 = vpack.c.b16 %v1565, %v1564
      %v1699 = vpack.c.b16 %v1567, %v1566
      %v1700 = vpack.c.b16 %v1569, %v1568
      %v1701 = vpack.c.b16 %v1571, %v1570
      %v1702 = vpack.c.b16 %v1573, %v1572
      %v1703 = vpack.c.b16 %v1575, %v1574
      %v1704 = vpack.c.b16 %v1577, %v1576
      %v1705 = vpack.c.b16 %v1579, %v1578
      %v1706 = vpack.c.b16 %v1581, %v1580
      %v1707 = vpack.c.b16 %v1583, %v1582
      %v1708 = vpack.c.b16 %v1585, %v1584
      %v1709 = vpack.c.b16 %v1587, %v1586
      %v1710 = vpack.c.b16 %v1589, %v1588
      %v1711 = vpack.c.b16 %v1591, %v1590
      %v1712 = vpack.c.b16 %v1593, %v1592
      %v1713 = vpack.c.b16 %v1595, %v1594
      %v1714 = vpack.c.b16 %v1597, %v1596
      %v1715 = vpack.c.b16 %v1599, %v1598
      %v1716 = vpack.c.b16 %v1601, %v1600
      %v1717 = vpack.c.b16 %v1603, %v1602
      %v1718 = vpack.c.b16 %v1605, %v1604
      %v1719 = vpack.c.b16 %v1607, %v1606
      %v1720 = vpack.c.b16 %v1609, %v1608
      %v1721 = vpack.c.b16 %v1611, %v1610
      %v1722 = vpack.c.b16 %v1613, %v1612
      %v1723 = vpack.c.b16 %v1615, %v1614
      %v1724 = vpack.c.b16 %v1617, %v1616
      %v1725 = vpack.c.b16 %v1619, %v1618
      %v1726 = vpack.c.b16 %v1621, %v1620
      %v1727 = vpack.c.b16 %v1623, %v1622
      %v1728 = vpack.c.b16 %v1625, %v1624
      %v1729 = vpack.c.b16 %v1627, %v1626
      %v1730 = vpack.c.b16 %v1629, %v1628
      %v1731 = vpack.c.b16 %v1631, %v1630
      %v1732 = vpack.c.b16 %v1633, %v1632
      %v1733 = vpack.c.b16 %v1635, %v1634
      %v1734 = vpack.c.b16 %v1637, %v1636
      %v1735 = vpack.c.b16 %v1639, %v1638
      %v1736 = vpack.c.b16 %v1641, %v1640
      %v1737 = vpack.c.b16 %v1643, %v1642
      %v1738 = vpack.c.b16 %v1645, %v1644
      %v1739 = vpack.c.b16 %v1647, %v1646
      %v1740 = vpack.c.b16 %v1649, %v1648
      %v1741 = vpack.c.b16 %v1651, %v1650
      %v1742 = vpack.c.b16 %v1653, %v1652
      %v1743 = vpack.c.b16 %v1655, %v1654
      %v1744 = vpack.c.b16 %v1657, %v1656
      %v1745 = vpack.c.b16 %v1659, %v1658
      %v1746 = vpack.c.b16 %v1661, %v1660
      %v1747 = vpack.c.b16 %v1663, %v1662
      %v1748 = vpack.c.b16 %v1665, %v1664
      %v1749 = vpack.c.b16 %v1667, %v1666
      %v1750 = vpack.c.b16 %v1669, %v1668
      %v1751 = vpack.c.b16 %v1671, %v1670
      %v1752 = vpack.c.b16 %v1673, %v1672
      %v1753 = vpack.c.b16 %v1675, %v1674
      %v1754 = vpack.c.b16 %v1677, %v1676
      %v1755 = vpack.c.b16 %v1679, %v1678
      %v1756 = vpack.c.b16 %v1681, %v1680
      %v1757 = vpack.c.b16 %v1683, %v1682
      %v1758 = vpack.c.b16 %v1685, %v1684
      %v1759 = vpack.c.b16 %v1687, %v1686
      %1832 = vmatprep.subr.bf16.mxu0 0
      %1833 = vmatpush1.bf16.msra.mxu0 %v1688
      %1834 = vmatprep.subr.bf16.mxu0 0
      %1835 = vmatpush1.bf16.msra.mxu0 %v1689
      %1836 = vmatprep.subr.bf16.mxu0 0
      %1837 = vmatpush1.bf16.msra.mxu0 %v1690
      %1838 = vmatprep.subr.bf16.mxu0 0
      %1839 = vmatpush1.bf16.msra.mxu0 %v1691
      %1840 = vmatprep.subr.bf16.mxu0 0
      %1841 = vmatpush1.bf16.msra.mxu0 %v1692
      %1842 = vmatprep.subr.bf16.mxu0 0
      %1843 = vmatpush1.bf16.msra.mxu0 %v1693
      %1844 = vmatprep.subr.bf16.mxu0 0
      %1845 = vmatpush1.bf16.msra.mxu0 %v1694
      %1846 = vmatprep.subr.bf16.mxu0 0
      %1847 = vmatpush1.bf16.msra.mxu0 %v1695
      %1848 = vmatprep.subr.bf16.mxu0 0
      %1849 = vmatpush1.bf16.msra.mxu0 %v1696
      %1850 = vmatprep.subr.bf16.mxu0 0
      %1851 = vmatpush1.bf16.msra.mxu0 %v1697
      %1852 = vmatprep.subr.bf16.mxu0 0
      %1853 = vmatpush1.bf16.msra.mxu0 %v1698
      %1854 = vmatprep.subr.bf16.mxu0 0
      %1855 = vmatpush1.bf16.msra.mxu0 %v1699
      %1856 = vmatprep.subr.bf16.mxu0 0
      %1857 = vmatpush1.bf16.msra.mxu0 %v1700
      %1858 = vmatprep.subr.bf16.mxu0 0
      %1859 = vmatpush1.bf16.msra.mxu0 %v1701
      %1860 = vmatprep.subr.bf16.mxu0 0
      %1861 = vmatpush1.bf16.msra.mxu0 %v1702
      %1862 = vmatprep.subr.bf16.mxu0 0
      %1863 = vmatpush1.bf16.msra.mxu0 %v1703
      %1864 = vmatprep.mubr.bf16.mxu0 %v1159
      %1865 = vmatmul.mubr.bf16.gmra.mrb[0].mxu0 %v1143
      %v1866 = vpop.f32.mrb[0].mxu0
      %v1867 = vadd.f32 0.0, %v1866
      %v1868 = vpop.f32.mrb[0].mxu0
      %v1869 = vpop.f32.mrb[0].mxu0
      %v1870 = vadd.f32 0.0, %v1869
      %v1871 = vpop.f32.mrb[0].mxu0
      %1872 = vmatprep.mubr.bf16.mxu0 %v1160
      %1873 = vmatmul.mubr.bf16.gmra.mrb[0].mxu0 %v1144
      %v1874 = vpop.f32.mrb[0].mxu0
      %v1875 = vadd.f32 0.0, %v1874
      %v1876 = vpop.f32.mrb[0].mxu0
      %v1877 = vpop.f32.mrb[0].mxu0
      %v1878 = vadd.f32 0.0, %v1877
      %v1879 = vpop.f32.mrb[0].mxu0
      %1880 = vmatprep.mubr.bf16.mxu0 %v1161
      %1881 = vmatmul.mubr.bf16.gmra.mrb[0].mxu0 %v1145
      %v1882 = vpop.f32.mrb[0].mxu0
      %v1883 = vadd.f32 0.0, %v1882
      %v1884 = vpop.f32.mrb[0].mxu0
      %v1885 = vpop.f32.mrb[0].mxu0
      %v1886 = vadd.f32 0.0, %v1885
      %v1887 = vpop.f32.mrb[0].mxu0
      %1888 = vmatprep.mubr.bf16.mxu0 %v1162
      %1889 = vmatmul.mubr.bf16.gmra.mrb[0].mxu0 %v1146
      %v1890 = vpop.f32.mrb[0].mxu0
      %v1891 = vadd.f32 0.0, %v1890
      %v1892 = vpop.f32.mrb[0].mxu0
      %v1893 = vpop.f32.mrb[0].mxu0
      %v1894 = vadd.f32 0.0, %v1893
      %v1895 = vpop.f32.mrb[0].mxu0
      %1896 = vmatprep.mubr.bf16.mxu0 %v1163
      %1897 = vmatmul.mubr.bf16.gmra.mrb[0].mxu0 %v1147
      %v1898 = vpop.f32.mrb[0].mxu0
      %v1899 = vadd.f32 0.0, %v1898
      %v1900 = vpop.f32.mrb[0].mxu0
      %v1901 = vpop.f32.mrb[0].mxu0
      %v1902 = vadd.f32 0.0, %v1901
      %v1903 = vpop.f32.mrb[0].mxu0
      %1904 = vmatprep.mubr.bf16.mxu0 %v1164
      %1905 = vmatmul.mubr.bf16.gmra.mrb[0].mxu0 %v1148
      %v1906 = vpop.f32.mrb[0].mxu0
      %v1907 = vadd.f32 0.0, %v1906
      %v1908 = vpop.f32.mrb[0].mxu0
      %v1909 = vpop.f32.mrb[0].mxu0
      %v1910 = vadd.f32 0.0, %v1909
      %v1911 = vpop.f32.mrb[0].mxu0
      %1912 = vmatprep.mubr.bf16.mxu0 %v1165
      %1913 = vmatmul.mubr.bf16.gmra.mrb[0].mxu0 %v1149
      %v1914 = vpop.f32.mrb[0].mxu0
      %v1915 = vadd.f32 0.0, %v1914
      %v1916 = vpop.f32.mrb[0].mxu0
      %v1917 = vpop.f32.mrb[0].mxu0
      %v1918 = vadd.f32 0.0, %v1917
      %v1919 = vpop.f32.mrb[0].mxu0
      %1920 = vmatprep.mubr.bf16.mxu0 %v1166
      %1921 = vmatmul.mubr.bf16.gmra.mrb[0].mxu0 %v1150
      %v1922 = vpop.f32.mrb[0].mxu0
      %v1923 = vadd.f32 0.0, %v1922
      %v1924 = vpop.f32.mrb[0].mxu0
      %v1925 = vpop.f32.mrb[0].mxu0
      %v1926 = vadd.f32 0.0, %v1925
      %v1927 = vpop.f32.mrb[0].mxu0
      %1928 = vmatprep.mubr.bf16.mxu0 %v1167
      %1929 = vmatmul.mubr.bf16.gmra.mrb[0].mxu0 %v1151
      %v1930 = vpop.f32.mrb[0].mxu0
      %v1931 = vadd.f32 0.0, %v1930
      %v1932 = vpop.f32.mrb[0].mxu0
      %v1933 = vpop.f32.mrb[0].mxu0
      %v1934 = vadd.f32 0.0, %v1933
      %v1935 = vpop.f32.mrb[0].mxu0
      %1936 = vmatprep.mubr.bf16.mxu0 %v1168
      %1937 = vmatmul.mubr.bf16.gmra.mrb[0].mxu0 %v1152
      %v1938 = vpop.f32.mrb[0].mxu0
      %v1939 = vadd.f32 0.0, %v1938
      %v1940 = vpop.f32.mrb[0].mxu0
      %v1941 = vpop.f32.mrb[0].mxu0
      %v1942 = vadd.f32 0.0, %v1941
      %v1943 = vpop.f32.mrb[0].mxu0
      %1944 = vmatprep.mubr.bf16.mxu0 %v1169
      %1945 = vmatmul.mubr.bf16.gmra.mrb[0].mxu0 %v1153
      %v1946 = vpop.f32.mrb[0].mxu0
      %v1947 = vadd.f32 0.0, %v1946
      %v1948 = vpop.f32.mrb[0].mxu0
      %v1949 = vpop.f32.mrb[0].mxu0
      %v1950 = vadd.f32 0.0, %v1949
      %v1951 = vpop.f32.mrb[0].mxu0
      %1952 = vmatprep.mubr.bf16.mxu0 %v1170
      %1953 = vmatmul.mubr.bf16.gmra.mrb[0].mxu0 %v1154
      %v1954 = vpop.f32.mrb[0].mxu0
      %v1955 = vadd.f32 0.0, %v1954
      %v1956 = vpop.f32.mrb[0].mxu0
      %v1957 = vpop.f32.mrb[0].mxu0
      %v1958 = vadd.f32 0.0, %v1957
      %v1959 = vpop.f32.mrb[0].mxu0
      %1960 = vmatprep.mubr.bf16.mxu0 %v1171
      %1961 = vmatmul.mubr.bf16.gmra.mrb[0].mxu0 %v1155
      %v1962 = vpop.f32.mrb[0].mxu0
      %v1963 = vadd.f32 0.0, %v1962
      %v1964 = vpop.f32.mrb[0].mxu0
      %v1965 = vpop.f32.mrb[0].mxu0
      %v1966 = vadd.f32 0.0, %v1965
      %v1967 = vpop.f32.mrb[0].mxu0
      %1968 = vmatprep.mubr.bf16.mxu0 %v1172
      %1969 = vmatmul.mubr.bf16.gmra.mrb[0].mxu0 %v1156
      %v1970 = vpop.f32.mrb[0].mxu0
      %v1971 = vadd.f32 0.0, %v1970
      %v1972 = vpop.f32.mrb[0].mxu0
      %v1973 = vpop.f32.mrb[0].mxu0
      %v1974 = vadd.f32 0.0, %v1973
      %v1975 = vpop.f32.mrb[0].mxu0
      %1976 = vmatprep.mubr.bf16.mxu0 %v1173
      %1977 = vmatmul.mubr.bf16.gmra.mrb[0].mxu0 %v1157
      %v1978 = vpop.f32.mrb[0].mxu0
      %v1979 = vadd.f32 0.0, %v1978
      %v1980 = vpop.f32.mrb[0].mxu0
      %v1981 = vpop.f32.mrb[0].mxu0
      %v1982 = vadd.f32 0.0, %v1981
      %v1983 = vpop.f32.mrb[0].mxu0
      %1984 = vmatprep.mubr.bf16.mxu0 %v1174
      %1985 = vmatmul.mubr.bf16.gmra.mrb[0].mxu0 %v1158
      %v1986 = vpop.f32.mrb[0].mxu0
      %v1987 = vadd.f32 0.0, %v1986
      %v1988 = vpop.f32.mrb[0].mxu0
      %v1989 = vpop.f32.mrb[0].mxu0
      %v1990 = vadd.f32 0.0, %v1989
      %v1991 = vpop.f32.mrb[0].mxu0
      %1992 = vdwg.mxu0
      %1993 = vmatprep.subr.bf16.mxu0 0
      %1994 = vmatpush1.bf16.msra.mxu0 %v1704
      %1995 = vmatprep.subr.bf16.mxu0 0
      %1996 = vmatpush1.bf16.msra.mxu0 %v1705
      %1997 = vmatprep.subr.bf16.mxu0 0
      %1998 = vmatpush1.bf16.msra.mxu0 %v1706
      %1999 = vmatprep.subr.bf16.mxu0 0
      %2000 = vmatpush1.bf16.msra.mxu0 %v1707
      %2001 = vmatprep.subr.bf16.mxu0 0
      %2002 = vmatpush1.bf16.msra.mxu0 %v1708
      %2003 = vmatprep.subr.bf16.mxu0 0
      %2004 = vmatpush1.bf16.msra.mxu0 %v1709
      %2005 = vmatprep.subr.bf16.mxu0 0
      %2006 = vmatpush1.bf16.msra.mxu0 %v1710
      %2007 = vmatprep.subr.bf16.mxu0 0
      %2008 = vmatpush1.bf16.msra.mxu0 %v1711
      %2009 = vmatprep.subr.bf16.mxu0 0
      %2010 = vmatpush1.bf16.msra.mxu0 %v1712
      %2011 = vmatprep.subr.bf16.mxu0 0
      %2012 = vmatpush1.bf16.msra.mxu0 %v1713
      %2013 = vmatprep.subr.bf16.mxu0 0
      %2014 = vmatpush1.bf16.msra.mxu0 %v1714
      %2015 = vmatprep.subr.bf16.mxu0 0
      %2016 = vmatpush1.bf16.msra.mxu0 %v1715
      %2017 = vmatprep.subr.bf16.mxu0 0
      %2018 = vmatpush1.bf16.msra.mxu0 %v1716
      %2019 = vmatprep.subr.bf16.mxu0 0
      %2020 = vmatpush1.bf16.msra.mxu0 %v1717
      %2021 = vmatprep.subr.bf16.mxu0 0
      %2022 = vmatpush1.bf16.msra.mxu0 %v1718
      %2023 = vmatprep.subr.bf16.mxu0 0
      %2024 = vmatpush1.bf16.msra.mxu0 %v1719
      %2025 = vmatprep.mubr.bf16.mxu0 %v1144
      %2026 = vmatmul.mubr.bf16.gmra.mrb[0].mxu0 %v1240
      %v2027 = vpop.f32.mrb[0].mxu0
      %v2028 = vadd.f32 %v1867, %v2027
      %v2029 = vpop.f32.mrb[0].mxu0
      %v2030 = vpop.f32.mrb[0].mxu0
      %v2031 = vadd.f32 %v1870, %v2030
      %v2032 = vpop.f32.mrb[0].mxu0
      %2033 = vmatprep.mubr.bf16.mxu0 %v1145
      %2034 = vmatmul.mubr.bf16.gmra.mrb[0].mxu0 %v1241
      %v2035 = vpop.f32.mrb[0].mxu0
      %v2036 = vadd.f32 %v1875, %v2035
      %v2037 = vpop.f32.mrb[0].mxu0
      %v2038 = vpop.f32.mrb[0].mxu0
      %v2039 = vadd.f32 %v1878, %v2038
      %v2040 = vpop.f32.mrb[0].mxu0
      %2041 = vmatprep.mubr.bf16.mxu0 %v1146
      %2042 = vmatmul.mubr.bf16.gmra.mrb[0].mxu0 %v1242
      %v2043 = vpop.f32.mrb[0].mxu0
      %v2044 = vadd.f32 %v1883, %v2043
      %v2045 = vpop.f32.mrb[0].mxu0
      %v2046 = vpop.f32.mrb[0].mxu0
      %v2047 = vadd.f32 %v1886, %v2046
      %v2048 = vpop.f32.mrb[0].mxu0
      %2049 = vmatprep.mubr.bf16.mxu0 %v1147
      %2050 = vmatmul.mubr.bf16.gmra.mrb[0].mxu0 %v1243
      %v2051 = vpop.f32.mrb[0].mxu0
      %v2052 = vadd.f32 %v1891, %v2051
      %v2053 = vpop.f32.mrb[0].mxu0
      %v2054 = vpop.f32.mrb[0].mxu0
      %v2055 = vadd.f32 %v1894, %v2054
      %v2056 = vpop.f32.mrb[0].mxu0
      %2057 = vmatprep.mubr.bf16.mxu0 %v1148
      %2058 = vmatmul.mubr.bf16.gmra.mrb[0].mxu0 %v1244
      %v2059 = vpop.f32.mrb[0].mxu0
      %v2060 = vadd.f32 %v1899, %v2059
      %v2061 = vpop.f32.mrb[0].mxu0
      %v2062 = vpop.f32.mrb[0].mxu0
      %v2063 = vadd.f32 %v1902, %v2062
      %v2064 = vpop.f32.mrb[0].mxu0
      %2065 = vmatprep.mubr.bf16.mxu0 %v1149
      %2066 = vmatmul.mubr.bf16.gmra.mrb[0].mxu0 %v1245
      %v2067 = vpop.f32.mrb[0].mxu0
      %v2068 = vadd.f32 %v1907, %v2067
      %v2069 = vpop.f32.mrb[0].mxu0
      %v2070 = vpop.f32.mrb[0].mxu0
      %v2071 = vadd.f32 %v1910, %v2070
      %v2072 = vpop.f32.mrb[0].mxu0
      %2073 = vmatprep.mubr.bf16.mxu0 %v1150
      %2074 = vmatmul.mubr.bf16.gmra.mrb[0].mxu0 %v1246
      %v2075 = vpop.f32.mrb[0].mxu0
      %v2076 = vadd.f32 %v1915, %v2075
      %v2077 = vpop.f32.mrb[0].mxu0
      %v2078 = vpop.f32.mrb[0].mxu0
      %v2079 = vadd.f32 %v1918, %v2078
      %v2080 = vpop.f32.mrb[0].mxu0
      %2081 = vmatprep.mubr.bf16.mxu0 %v1151
      %2082 = vmatmul.mubr.bf16.gmra.mrb[0].mxu0 %v1247
      %v2083 = vpop.f32.mrb[0].mxu0
      %v2084 = vadd.f32 %v1923, %v2083
      %v2085 = vpop.f32.mrb[0].mxu0
      %v2086 = vpop.f32.mrb[0].mxu0
      %v2087 = vadd.f32 %v1926, %v2086
      %v2088 = vpop.f32.mrb[0].mxu0
      %2089 = vmatprep.mubr.bf16.mxu0 %v1152
      %2090 = vmatmul.mubr.bf16.gmra.mrb[0].mxu0 %v1248
      %v2091 = vpop.f32.mrb[0].mxu0
      %v2092 = vadd.f32 %v1931, %v2091
      %v2093 = vpop.f32.mrb[0].mxu0
      %v2094 = vpop.f32.mrb[0].mxu0
      %v2095 = vadd.f32 %v1934, %v2094
      %v2096 = vpop.f32.mrb[0].mxu0
      %2097 = vmatprep.mubr.bf16.mxu0 %v1153
      %2098 = vmatmul.mubr.bf16.gmra.mrb[0].mxu0 %v1249
      %v2099 = vpop.f32.mrb[0].mxu0
      %v2100 = vadd.f32 %v1939, %v2099
      %v2101 = vpop.f32.mrb[0].mxu0
      %v2102 = vpop.f32.mrb[0].mxu0
      %v2103 = vadd.f32 %v1942, %v2102
      %v2104 = vpop.f32.mrb[0].mxu0
      %2105 = vmatprep.mubr.bf16.mxu0 %v1154
      %2106 = vmatmul.mubr.bf16.gmra.mrb[0].mxu0 %v1250
      %v2107 = vpop.f32.mrb[0].mxu0
      %v2108 = vadd.f32 %v1947, %v2107
      %v2109 = vpop.f32.mrb[0].mxu0
      %v2110 = vpop.f32.mrb[0].mxu0
      %v2111 = vadd.f32 %v1950, %v2110
      %v2112 = vpop.f32.mrb[0].mxu0
      %2113 = vmatprep.mubr.bf16.mxu0 %v1155
      %2114 = vmatmul.mubr.bf16.gmra.mrb[0].mxu0 %v1251
      %v2115 = vpop.f32.mrb[0].mxu0
      %v2116 = vadd.f32 %v1955, %v2115
      %v2117 = vpop.f32.mrb[0].mxu0
      %v2118 = vpop.f32.mrb[0].mxu0
      %v2119 = vadd.f32 %v1958, %v2118
      %v2120 = vpop.f32.mrb[0].mxu0
      %2121 = vmatprep.mubr.bf16.mxu0 %v1156
      %2122 = vmatmul.mubr.bf16.gmra.mrb[0].mxu0 %v1252
      %v2123 = vpop.f32.mrb[0].mxu0
      %v2124 = vadd.f32 %v1963, %v2123
      %v2125 = vpop.f32.mrb[0].mxu0
      %v2126 = vpop.f32.mrb[0].mxu0
      %v2127 = vadd.f32 %v1966, %v2126
      %v2128 = vpop.f32.mrb[0].mxu0
      %2129 = vmatprep.mubr.bf16.mxu0 %v1157
      %2130 = vmatmul.mubr.bf16.gmra.mrb[0].mxu0 %v1253
      %v2131 = vpop.f32.mrb[0].mxu0
      %v2132 = vadd.f32 %v1971, %v2131
      %v2133 = vpop.f32.mrb[0].mxu0
      %v2134 = vpop.f32.mrb[0].mxu0
      %v2135 = vadd.f32 %v1974, %v2134
      %v2136 = vpop.f32.mrb[0].mxu0
      %2137 = vmatprep.mubr.bf16.mxu0 %v1158
      %2138 = vmatmul.mubr.bf16.gmra.mrb[0].mxu0 %v1254
      %v2139 = vpop.f32.mrb[0].mxu0
      %v2140 = vadd.f32 %v1979, %v2139
      %v2141 = vpop.f32.mrb[0].mxu0
      %v2142 = vpop.f32.mrb[0].mxu0
      %v2143 = vadd.f32 %v1982, %v2142
      %v2144 = vpop.f32.mrb[0].mxu0
      %2145 = vmatprep.mubr.bf16.mxu0 %v1143
      %2146 = vmatmul.mubr.bf16.gmra.mrb[0].mxu0 %v1255
      %v2147 = vpop.f32.mrb[0].mxu0
      %v2148 = vadd.f32 %v1987, %v2147
      %v2149 = vpop.f32.mrb[0].mxu0
      %v2150 = vpop.f32.mrb[0].mxu0
      %v2151 = vadd.f32 %v1990, %v2150
      %v2152 = vpop.f32.mrb[0].mxu0
      %2153 = vdwg.mxu0
      %2154 = vmatprep.subr.bf16.mxu0 0
      %2155 = vmatpush1.bf16.msra.mxu0 %v1720
      %2156 = vmatprep.subr.bf16.mxu0 0
      %2157 = vmatpush1.bf16.msra.mxu0 %v1721
      %2158 = vmatprep.subr.bf16.mxu0 0
      %2159 = vmatpush1.bf16.msra.mxu0 %v1722
      %2160 = vmatprep.subr.bf16.mxu0 0
      %2161 = vmatpush1.bf16.msra.mxu0 %v1723
      %2162 = vmatprep.subr.bf16.mxu0 0
      %2163 = vmatpush1.bf16.msra.mxu0 %v1724
      %2164 = vmatprep.subr.bf16.mxu0 0
      %2165 = vmatpush1.bf16.msra.mxu0 %v1725
      %2166 = vmatprep.subr.bf16.mxu0 0
      %2167 = vmatpush1.bf16.msra.mxu0 %v1726
      %2168 = vmatprep.subr.bf16.mxu0 0
      %2169 = vmatpush1.bf16.msra.mxu0 %v1727
      %2170 = vmatprep.subr.bf16.mxu0 0
      %2171 = vmatpush1.bf16.msra.mxu0 %v1728
      %2172 = vmatprep.subr.bf16.mxu0 0
      %2173 = vmatpush1.bf16.msra.mxu0 %v1729
      %2174 = vmatprep.subr.bf16.mxu0 0
      %2175 = vmatpush1.bf16.msra.mxu0 %v1730
      %2176 = vmatprep.subr.bf16.mxu0 0
      %2177 = vmatpush1.bf16.msra.mxu0 %v1731
      %2178 = vmatprep.subr.bf16.mxu0 0
      %2179 = vmatpush1.bf16.msra.mxu0 %v1732
      %2180 = vmatprep.subr.bf16.mxu0 0
      %2181 = vmatpush1.bf16.msra.mxu0 %v1733
      %2182 = vmatprep.subr.bf16.mxu0 0
      %2183 = vmatpush1.bf16.msra.mxu0 %v1734
      %2184 = vmatprep.subr.bf16.mxu0 0
      %2185 = vmatpush1.bf16.msra.mxu0 %v1735
      %2186 = vmatprep.mubr.bf16.mxu0 %v1241
      %2187 = vmatmul.mubr.bf16.gmra.mrb[0].mxu0 %v1160
      %v2188 = vpop.f32.mrb[0].mxu0
      %v2189 = vadd.f32 %v2028, %v2188
      %v2190 = vpop.f32.mrb[0].mxu0
      %v2191 = vpop.f32.mrb[0].mxu0
      %v2192 = vadd.f32 %v2031, %v2191
      %v2193 = vpop.f32.mrb[0].mxu0
      %2194 = vmatprep.mubr.bf16.mxu0 %v1242
      %2195 = vmatmul.mubr.bf16.gmra.mrb[0].mxu0 %v1161
      %v2196 = vpop.f32.mrb[0].mxu0
      %v2197 = vadd.f32 %v2036, %v2196
      %v2198 = vpop.f32.mrb[0].mxu0
      %v2199 = vpop.f32.mrb[0].mxu0
      %v2200 = vadd.f32 %v2039, %v2199
      %v2201 = vpop.f32.mrb[0].mxu0
      %2202 = vmatprep.mubr.bf16.mxu0 %v1243
      %2203 = vmatmul.mubr.bf16.gmra.mrb[0].mxu0 %v1162
      %v2204 = vpop.f32.mrb[0].mxu0
      %v2205 = vadd.f32 %v2044, %v2204
      %v2206 = vpop.f32.mrb[0].mxu0
      %v2207 = vpop.f32.mrb[0].mxu0
      %v2208 = vadd.f32 %v2047, %v2207
      %v2209 = vpop.f32.mrb[0].mxu0
      %2210 = vmatprep.mubr.bf16.mxu0 %v1244
      %2211 = vmatmul.mubr.bf16.gmra.mrb[0].mxu0 %v1163
      %v2212 = vpop.f32.mrb[0].mxu0
      %v2213 = vadd.f32 %v2052, %v2212
      %v2214 = vpop.f32.mrb[0].mxu0
      %v2215 = vpop.f32.mrb[0].mxu0
      %v2216 = vadd.f32 %v2055, %v2215
      %v2217 = vpop.f32.mrb[0].mxu0
      %2218 = vmatprep.mubr.bf16.mxu0 %v1245
      %2219 = vmatmul.mubr.bf16.gmra.mrb[0].mxu0 %v1164
      %v2220 = vpop.f32.mrb[0].mxu0
      %v2221 = vadd.f32 %v2060, %v2220
      %v2222 = vpop.f32.mrb[0].mxu0
      %v2223 = vpop.f32.mrb[0].mxu0
      %v2224 = vadd.f32 %v2063, %v2223
      %v2225 = vpop.f32.mrb[0].mxu0
      %2226 = vmatprep.mubr.bf16.mxu0 %v1246
      %2227 = vmatmul.mubr.bf16.gmra.mrb[0].mxu0 %v1165
      %v2228 = vpop.f32.mrb[0].mxu0
      %v2229 = vadd.f32 %v2068, %v2228
      %v2230 = vpop.f32.mrb[0].mxu0
      %v2231 = vpop.f32.mrb[0].mxu0
      %v2232 = vadd.f32 %v2071, %v2231
      %v2233 = vpop.f32.mrb[0].mxu0
      %2234 = vmatprep.mubr.bf16.mxu0 %v1247
      %2235 = vmatmul.mubr.bf16.gmra.mrb[0].mxu0 %v1166
      %v2236 = vpop.f32.mrb[0].mxu0
      %v2237 = vadd.f32 %v2076, %v2236
      %v2238 = vpop.f32.mrb[0].mxu0
      %v2239 = vpop.f32.mrb[0].mxu0
      %v2240 = vadd.f32 %v2079, %v2239
      %v2241 = vpop.f32.mrb[0].mxu0
      %2242 = vmatprep.mubr.bf16.mxu0 %v1248
      %2243 = vmatmul.mubr.bf16.gmra.mrb[0].mxu0 %v1167
      %v2244 = vpop.f32.mrb[0].mxu0
      %v2245 = vadd.f32 %v2084, %v2244
      %v2246 = vpop.f32.mrb[0].mxu0
      %v2247 = vpop.f32.mrb[0].mxu0
      %v2248 = vadd.f32 %v2087, %v2247
      %v2249 = vpop.f32.mrb[0].mxu0
      %2250 = vmatprep.mubr.bf16.mxu0 %v1249
      %2251 = vmatmul.mubr.bf16.gmra.mrb[0].mxu0 %v1168
      %v2252 = vpop.f32.mrb[0].mxu0
      %v2253 = vadd.f32 %v2092, %v2252
      %v2254 = vpop.f32.mrb[0].mxu0
      %v2255 = vpop.f32.mrb[0].mxu0
      %v2256 = vadd.f32 %v2095, %v2255
      %v2257 = vpop.f32.mrb[0].mxu0
      %2258 = vmatprep.mubr.bf16.mxu0 %v1250
      %2259 = vmatmul.mubr.bf16.gmra.mrb[0].mxu0 %v1169
      %v2260 = vpop.f32.mrb[0].mxu0
      %v2261 = vadd.f32 %v2100, %v2260
      %v2262 = vpop.f32.mrb[0].mxu0
      %v2263 = vpop.f32.mrb[0].mxu0
      %v2264 = vadd.f32 %v2103, %v2263
      %v2265 = vpop.f32.mrb[0].mxu0
      %2266 = vmatprep.mubr.bf16.mxu0 %v1251
      %2267 = vmatmul.mubr.bf16.gmra.mrb[0].mxu0 %v1170
      %v2268 = vpop.f32.mrb[0].mxu0
      %v2269 = vadd.f32 %v2108, %v2268
      %v2270 = vpop.f32.mrb[0].mxu0
      %v2271 = vpop.f32.mrb[0].mxu0
      %v2272 = vadd.f32 %v2111, %v2271
      %v2273 = vpop.f32.mrb[0].mxu0
      %2274 = vmatprep.mubr.bf16.mxu0 %v1252
      %2275 = vmatmul.mubr.bf16.gmra.mrb[0].mxu0 %v1171
      %v2276 = vpop.f32.mrb[0].mxu0
      %v2277 = vadd.f32 %v2116, %v2276
      %v2278 = vpop.f32.mrb[0].mxu0
      %v2279 = vpop.f32.mrb[0].mxu0
      %v2280 = vadd.f32 %v2119, %v2279
      %v2281 = vpop.f32.mrb[0].mxu0
      %2282 = vmatprep.mubr.bf16.mxu0 %v1253
      %2283 = vmatmul.mubr.bf16.gmra.mrb[0].mxu0 %v1172
      %v2284 = vpop.f32.mrb[0].mxu0
      %v2285 = vadd.f32 %v2124, %v2284
      %v2286 = vpop.f32.mrb[0].mxu0
      %v2287 = vpop.f32.mrb[0].mxu0
      %v2288 = vadd.f32 %v2127, %v2287
      %v2289 = vpop.f32.mrb[0].mxu0
      %2290 = vmatprep.mubr.bf16.mxu0 %v1254
      %2291 = vmatmul.mubr.bf16.gmra.mrb[0].mxu0 %v1173
      %v2292 = vpop.f32.mrb[0].mxu0
      %v2293 = vadd.f32 %v2132, %v2292
      %v2294 = vpop.f32.mrb[0].mxu0
      %v2295 = vpop.f32.mrb[0].mxu0
      %v2296 = vadd.f32 %v2135, %v2295
      %v2297 = vpop.f32.mrb[0].mxu0
      %2298 = vmatprep.mubr.bf16.mxu0 %v1255
      %2299 = vmatmul.mubr.bf16.gmra.mrb[0].mxu0 %v1174
      %v2300 = vpop.f32.mrb[0].mxu0
      %v2301 = vadd.f32 %v2140, %v2300
      %v2302 = vpop.f32.mrb[0].mxu0
      %v2303 = vpop.f32.mrb[0].mxu0
      %v2304 = vadd.f32 %v2143, %v2303
      %v2305 = vpop.f32.mrb[0].mxu0
      %2306 = vmatprep.mubr.bf16.mxu0 %v1240
      %2307 = vmatmul.mubr.bf16.gmra.mrb[0].mxu0 %v1159
      %v2308 = vpop.f32.mrb[0].mxu0
      %v2309 = vadd.f32 %v2148, %v2308
      %v2310 = vpop.f32.mrb[0].mxu0
      %v2311 = vpop.f32.mrb[0].mxu0
      %v2312 = vadd.f32 %v2151, %v2311
      %v2313 = vpop.f32.mrb[0].mxu0
      %2314 = vdwg.mxu0
      %2315 = vmatprep.subr.bf16.mxu0 0
      %2316 = vmatpush1.bf16.msra.mxu0 %v1736
      %2317 = vmatprep.subr.bf16.mxu0 0
      %2318 = vmatpush1.bf16.msra.mxu0 %v1737
      %2319 = vmatprep.subr.bf16.mxu0 0
      %2320 = vmatpush1.bf16.msra.mxu0 %v1738
      %2321 = vmatprep.subr.bf16.mxu0 0
      %2322 = vmatpush1.bf16.msra.mxu0 %v1739
      %2323 = vmatprep.subr.bf16.mxu0 0
      %2324 = vmatpush1.bf16.msra.mxu0 %v1740
      %2325 = vmatprep.subr.bf16.mxu0 0
      %2326 = vmatpush1.bf16.msra.mxu0 %v1741
      %2327 = vmatprep.subr.bf16.mxu0 0
      %2328 = vmatpush1.bf16.msra.mxu0 %v1742
      %2329 = vmatprep.subr.bf16.mxu0 0
      %2330 = vmatpush1.bf16.msra.mxu0 %v1743
      %2331 = vmatprep.subr.bf16.mxu0 0
      %2332 = vmatpush1.bf16.msra.mxu0 %v1744
      %2333 = vmatprep.subr.bf16.mxu0 0
      %2334 = vmatpush1.bf16.msra.mxu0 %v1745
      %2335 = vmatprep.subr.bf16.mxu0 0
      %2336 = vmatpush1.bf16.msra.mxu0 %v1746
      %2337 = vmatprep.subr.bf16.mxu0 0
      %2338 = vmatpush1.bf16.msra.mxu0 %v1747
      %2339 = vmatprep.subr.bf16.mxu0 0
      %2340 = vmatpush1.bf16.msra.mxu0 %v1748
      %2341 = vmatprep.subr.bf16.mxu0 0
      %2342 = vmatpush1.bf16.msra.mxu0 %v1749
      %2343 = vmatprep.subr.bf16.mxu0 0
      %2344 = vmatpush1.bf16.msra.mxu0 %v1750
      %2345 = vmatprep.subr.bf16.mxu0 0
      %2346 = vmatpush1.bf16.msra.mxu0 %v1751
      %2347 = vmatprep.mubr.bf16.mxu0 %v1161
      %2348 = vmatmul.mubr.bf16.gmra.mrb[0].mxu0 %v1145
      %v2349 = vpop.f32.mrb[0].mxu0
      %v2350 = vadd.f32 %v2189, %v2349
      %v2351 = vpop.f32.mrb[0].mxu0
      %v2352 = vpop.f32.mrb[0].mxu0
      %v2353 = vadd.f32 %v2192, %v2352
      %v2354 = vpop.f32.mrb[0].mxu0
      %2355 = vmatprep.mubr.bf16.mxu0 %v1162
      %2356 = vmatmul.mubr.bf16.gmra.mrb[0].mxu0 %v1146
      %v2357 = vpop.f32.mrb[0].mxu0
      %v2358 = vadd.f32 %v2197, %v2357
      %v2359 = vpop.f32.mrb[0].mxu0
      %v2360 = vpop.f32.mrb[0].mxu0
      %v2361 = vadd.f32 %v2200, %v2360
      %v2362 = vpop.f32.mrb[0].mxu0
      %2363 = vmatprep.mubr.bf16.mxu0 %v1163
      %2364 = vmatmul.mubr.bf16.gmra.mrb[0].mxu0 %v1147
      %v2365 = vpop.f32.mrb[0].mxu0
      %v2366 = vadd.f32 %v2205, %v2365
      %v2367 = vpop.f32.mrb[0].mxu0
      %v2368 = vpop.f32.mrb[0].mxu0
      %v2369 = vadd.f32 %v2208, %v2368
      %v2370 = vpop.f32.mrb[0].mxu0
      %2371 = vmatprep.mubr.bf16.mxu0 %v1164
      %2372 = vmatmul.mubr.bf16.gmra.mrb[0].mxu0 %v1148
      %v2373 = vpop.f32.mrb[0].mxu0
      %v2374 = vadd.f32 %v2213, %v2373
      %v2375 = vpop.f32.mrb[0].mxu0
      %v2376 = vpop.f32.mrb[0].mxu0
      %v2377 = vadd.f32 %v2216, %v2376
      %v2378 = vpop.f32.mrb[0].mxu0
      %2379 = vmatprep.mubr.bf16.mxu0 %v1165
      %2380 = vmatmul.mubr.bf16.gmra.mrb[0].mxu0 %v1149
      %v2381 = vpop.f32.mrb[0].mxu0
      %v2382 = vadd.f32 %v2221, %v2381
      %v2383 = vpop.f32.mrb[0].mxu0
      %v2384 = vpop.f32.mrb[0].mxu0
      %v2385 = vadd.f32 %v2224, %v2384
      %v2386 = vpop.f32.mrb[0].mxu0
      %2387 = vmatprep.mubr.bf16.mxu0 %v1166
      %2388 = vmatmul.mubr.bf16.gmra.mrb[0].mxu0 %v1150
      %v2389 = vpop.f32.mrb[0].mxu0
      %v2390 = vadd.f32 %v2229, %v2389
      %v2391 = vpop.f32.mrb[0].mxu0
      %v2392 = vpop.f32.mrb[0].mxu0
      %v2393 = vadd.f32 %v2232, %v2392
      %v2394 = vpop.f32.mrb[0].mxu0
      %2395 = vmatprep.mubr.bf16.mxu0 %v1167
      %2396 = vmatmul.mubr.bf16.gmra.mrb[0].mxu0 %v1151
      %v2397 = vpop.f32.mrb[0].mxu0
      %v2398 = vadd.f32 %v2237, %v2397
      %v2399 = vpop.f32.mrb[0].mxu0
      %v2400 = vpop.f32.mrb[0].mxu0
      %v2401 = vadd.f32 %v2240, %v2400
      %v2402 = vpop.f32.mrb[0].mxu0
      %2403 = vmatprep.mubr.bf16.mxu0 %v1168
      %2404 = vmatmul.mubr.bf16.gmra.mrb[0].mxu0 %v1152
      %v2405 = vpop.f32.mrb[0].mxu0
      %v2406 = vadd.f32 %v2245, %v2405
      %v2407 = vpop.f32.mrb[0].mxu0
      %v2408 = vpop.f32.mrb[0].mxu0
      %v2409 = vadd.f32 %v2248, %v2408
      %v2410 = vpop.f32.mrb[0].mxu0
      %2411 = vmatprep.mubr.bf16.mxu0 %v1169
      %2412 = vmatmul.mubr.bf16.gmra.mrb[0].mxu0 %v1153
      %v2413 = vpop.f32.mrb[0].mxu0
      %v2414 = vadd.f32 %v2253, %v2413
      %v2415 = vpop.f32.mrb[0].mxu0
      %v2416 = vpop.f32.mrb[0].mxu0
      %v2417 = vadd.f32 %v2256, %v2416
      %v2418 = vpop.f32.mrb[0].mxu0
      %2419 = vmatprep.mubr.bf16.mxu0 %v1170
      %2420 = vmatmul.mubr.bf16.gmra.mrb[0].mxu0 %v1154
      %v2421 = vpop.f32.mrb[0].mxu0
      %v2422 = vadd.f32 %v2261, %v2421
      %v2423 = vpop.f32.mrb[0].mxu0
      %v2424 = vpop.f32.mrb[0].mxu0
      %v2425 = vadd.f32 %v2264, %v2424
      %v2426 = vpop.f32.mrb[0].mxu0
      %2427 = vmatprep.mubr.bf16.mxu0 %v1171
      %2428 = vmatmul.mubr.bf16.gmra.mrb[0].mxu0 %v1155
      %v2429 = vpop.f32.mrb[0].mxu0
      %v2430 = vadd.f32 %v2269, %v2429
      %v2431 = vpop.f32.mrb[0].mxu0
      %v2432 = vpop.f32.mrb[0].mxu0
      %v2433 = vadd.f32 %v2272, %v2432
      %v2434 = vpop.f32.mrb[0].mxu0
      %2435 = vmatprep.mubr.bf16.mxu0 %v1172
      %2436 = vmatmul.mubr.bf16.gmra.mrb[0].mxu0 %v1156
      %v2437 = vpop.f32.mrb[0].mxu0
      %v2438 = vadd.f32 %v2277, %v2437
      %v2439 = vpop.f32.mrb[0].mxu0
      %v2440 = vpop.f32.mrb[0].mxu0
      %v2441 = vadd.f32 %v2280, %v2440
      %v2442 = vpop.f32.mrb[0].mxu0
      %2443 = vmatprep.mubr.bf16.mxu0 %v1173
      %2444 = vmatmul.mubr.bf16.gmra.mrb[0].mxu0 %v1157
      %v2445 = vpop.f32.mrb[0].mxu0
      %v2446 = vadd.f32 %v2285, %v2445
      %v2447 = vpop.f32.mrb[0].mxu0
      %v2448 = vpop.f32.mrb[0].mxu0
      %v2449 = vadd.f32 %v2288, %v2448
      %v2450 = vpop.f32.mrb[0].mxu0
      %2451 = vmatprep.mubr.bf16.mxu0 %v1174
      %2452 = vmatmul.mubr.bf16.gmra.mrb[0].mxu0 %v1158
      %v2453 = vpop.f32.mrb[0].mxu0
      %v2454 = vadd.f32 %v2293, %v2453
      %v2455 = vpop.f32.mrb[0].mxu0
      %v2456 = vpop.f32.mrb[0].mxu0
      %v2457 = vadd.f32 %v2296, %v2456
      %v2458 = vpop.f32.mrb[0].mxu0
      %2459 = vmatprep.mubr.bf16.mxu0 %v1159
      %2460 = vmatmul.mubr.bf16.gmra.mrb[0].mxu0 %v1143
      %v2461 = vpop.f32.mrb[0].mxu0
      %v2462 = vadd.f32 %v2301, %v2461
      %v2463 = vpop.f32.mrb[0].mxu0
      %v2464 = vpop.f32.mrb[0].mxu0
      %v2465 = vadd.f32 %v2304, %v2464
      %v2466 = vpop.f32.mrb[0].mxu0
      %2467 = vmatprep.mubr.bf16.mxu0 %v1160
      %2468 = vmatmul.mubr.bf16.gmra.mrb[0].mxu0 %v1144
      %v2469 = vpop.f32.mrb[0].mxu0
      %v2470 = vadd.f32 %v2309, %v2469
      %v2471 = vpop.f32.mrb[0].mxu0
      %v2472 = vpop.f32.mrb[0].mxu0
      %v2473 = vadd.f32 %v2312, %v2472
      %v2474 = vpop.f32.mrb[0].mxu0
      %2475 = vdwg.mxu0
      %2476 = vmatprep.subr.bf16.mxu0 0
      %2477 = vmatpush1.bf16.msra.mxu0 %v1752
      %2478 = vmatprep.subr.bf16.mxu0 0
      %2479 = vmatpush1.bf16.msra.mxu0 %v1753
      %2480 = vmatprep.subr.bf16.mxu0 0
      %2481 = vmatpush1.bf16.msra.mxu0 %v1754
      %2482 = vmatprep.subr.bf16.mxu0 0
      %2483 = vmatpush1.bf16.msra.mxu0 %v1755
      %2484 = vmatprep.subr.bf16.mxu0 0
      %2485 = vmatpush1.bf16.msra.mxu0 %v1756
      %2486 = vmatprep.subr.bf16.mxu0 0
      %2487 = vmatpush1.bf16.msra.mxu0 %v1757
      %2488 = vmatprep.subr.bf16.mxu0 0
      %2489 = vmatpush1.bf16.msra.mxu0 %v1758
      %2490 = vmatprep.subr.bf16.mxu0 0
      %2491 = vmatpush1.bf16.msra.mxu0 %v1759
      %2492 = vmatprep.subr.bf16.mxu0 0
      %2493 = vmatpush1.bf16.msra.mxu0 0
      %2494 = vmatprep.subr.bf16.mxu0 0
      %2495 = vmatpush1.bf16.msra.mxu0 0
      %2496 = vmatprep.subr.bf16.mxu0 0
      %2497 = vmatpush1.bf16.msra.mxu0 0
      %2498 = vmatprep.subr.bf16.mxu0 0
      %2499 = vmatpush1.bf16.msra.mxu0 0
      %2500 = vmatprep.subr.bf16.mxu0 0
      %2501 = vmatpush1.bf16.msra.mxu0 0
      %2502 = vmatprep.subr.bf16.mxu0 0
      %2503 = vmatpush1.bf16.msra.mxu0 0
      %2504 = vmatprep.subr.bf16.mxu0 0
      %2505 = vmatpush1.bf16.msra.mxu0 0
      %2506 = vmatprep.subr.bf16.mxu0 0
      %2507 = vmatpush1.bf16.msra.mxu0 0
      %2508 = vmatprep.mubr.bf16.mxu0 0
      %2509 = vmatmul.mubr.bf16.gmra.mrb[0].mxu0 %v1242
      %v2510 = vpop.f32.mrb[0].mxu0
      %v2511 = vadd.f32 %v2350, %v2510
      %v2512 = vpop.f32.mrb[0].mxu0
      %v2513 = vpop.f32.mrb[0].mxu0
      %v2514 = vadd.f32 %v2353, %v2513
      %v2515 = vpop.f32.mrb[0].mxu0
      %2516 = vmatprep.mubr.bf16.mxu0 0
      %2517 = vmatmul.mubr.bf16.gmra.mrb[0].mxu0 %v1243
      %v2518 = vpop.f32.mrb[0].mxu0
      %v2519 = vadd.f32 %v2358, %v2518
      %v2520 = vpop.f32.mrb[0].mxu0
      %v2521 = vpop.f32.mrb[0].mxu0
      %v2522 = vadd.f32 %v2361, %v2521
      %v2523 = vpop.f32.mrb[0].mxu0
      %2524 = vmatprep.mubr.bf16.mxu0 0
      %2525 = vmatmul.mubr.bf16.gmra.mrb[0].mxu0 %v1244
      %v2526 = vpop.f32.mrb[0].mxu0
      %v2527 = vadd.f32 %v2366, %v2526
      %v2528 = vpop.f32.mrb[0].mxu0
      %v2529 = vpop.f32.mrb[0].mxu0
      %v2530 = vadd.f32 %v2369, %v2529
      %v2531 = vpop.f32.mrb[0].mxu0
      %2532 = vmatprep.mubr.bf16.mxu0 0
      %2533 = vmatmul.mubr.bf16.gmra.mrb[0].mxu0 %v1245
      %v2534 = vpop.f32.mrb[0].mxu0
      %v2535 = vadd.f32 %v2374, %v2534
      %v2536 = vpop.f32.mrb[0].mxu0
      %v2537 = vpop.f32.mrb[0].mxu0
      %v2538 = vadd.f32 %v2377, %v2537
      %v2539 = vpop.f32.mrb[0].mxu0
      %2540 = vmatprep.mubr.bf16.mxu0 0
      %2541 = vmatmul.mubr.bf16.gmra.mrb[0].mxu0 %v1246
      %v2542 = vpop.f32.mrb[0].mxu0
      %v2543 = vadd.f32 %v2382, %v2542
      %v2544 = vpop.f32.mrb[0].mxu0
      %v2545 = vpop.f32.mrb[0].mxu0
      %v2546 = vadd.f32 %v2385, %v2545
      %v2547 = vpop.f32.mrb[0].mxu0
      %2548 = vmatprep.mubr.bf16.mxu0 0
      %2549 = vmatmul.mubr.bf16.gmra.mrb[0].mxu0 %v1247
      %v2550 = vpop.f32.mrb[0].mxu0
      %v2551 = vadd.f32 %v2390, %v2550
      %v2552 = vpop.f32.mrb[0].mxu0
      %v2553 = vpop.f32.mrb[0].mxu0
      %v2554 = vadd.f32 %v2393, %v2553
      %v2555 = vpop.f32.mrb[0].mxu0
      %2556 = vmatprep.mubr.bf16.mxu0 0
      %2557 = vmatmul.mubr.bf16.gmra.mrb[0].mxu0 %v1248
      %v2558 = vpop.f32.mrb[0].mxu0
      %v2559 = vadd.f32 %v2398, %v2558
      %v2560 = vpop.f32.mrb[0].mxu0
      %v2561 = vpop.f32.mrb[0].mxu0
      %v2562 = vadd.f32 %v2401, %v2561
      %v2563 = vpop.f32.mrb[0].mxu0
      %2564 = vmatprep.mubr.bf16.mxu0 0
      %2565 = vmatmul.mubr.bf16.gmra.mrb[0].mxu0 %v1249
      %v2566 = vpop.f32.mrb[0].mxu0
      %v2567 = vadd.f32 %v2406, %v2566
      %v2568 = vpop.f32.mrb[0].mxu0
      %v2569 = vpop.f32.mrb[0].mxu0
      %v2570 = vadd.f32 %v2409, %v2569
      %v2571 = vpop.f32.mrb[0].mxu0
      %2572 = vmatprep.mubr.bf16.mxu0 0
      %2573 = vmatmul.mubr.bf16.gmra.mrb[0].mxu0 %v1250
      %v2574 = vpop.f32.mrb[0].mxu0
      %v2575 = vadd.f32 %v2414, %v2574
      %v2576 = vpop.f32.mrb[0].mxu0
      %v2577 = vpop.f32.mrb[0].mxu0
      %v2578 = vadd.f32 %v2417, %v2577
      %v2579 = vpop.f32.mrb[0].mxu0
      %2580 = vmatprep.mubr.bf16.mxu0 0
      %2581 = vmatmul.mubr.bf16.gmra.mrb[0].mxu0 %v1251
      %v2582 = vpop.f32.mrb[0].mxu0
      %v2583 = vadd.f32 %v2422, %v2582
      %v2584 = vpop.f32.mrb[0].mxu0
      %v2585 = vpop.f32.mrb[0].mxu0
      %v2586 = vadd.f32 %v2425, %v2585
      %v2587 = vpop.f32.mrb[0].mxu0
      %2588 = vmatprep.mubr.bf16.mxu0 0
      %2589 = vmatmul.mubr.bf16.gmra.mrb[0].mxu0 %v1252
      %v2590 = vpop.f32.mrb[0].mxu0
      %v2591 = vadd.f32 %v2430, %v2590
      %v2592 = vpop.f32.mrb[0].mxu0
      %v2593 = vpop.f32.mrb[0].mxu0
      %v2594 = vadd.f32 %v2433, %v2593
      %v2595 = vpop.f32.mrb[0].mxu0
      %2596 = vmatprep.mubr.bf16.mxu0 0
      %2597 = vmatmul.mubr.bf16.gmra.mrb[0].mxu0 %v1253
      %v2598 = vpop.f32.mrb[0].mxu0
      %v2599 = vadd.f32 %v2438, %v2598
      %v2600 = vpop.f32.mrb[0].mxu0
      %v2601 = vpop.f32.mrb[0].mxu0
      %v2602 = vadd.f32 %v2441, %v2601
      %v2603 = vpop.f32.mrb[0].mxu0
      %2604 = vmatprep.mubr.bf16.mxu0 0
      %2605 = vmatmul.mubr.bf16.gmra.mrb[0].mxu0 %v1254
      %v2606 = vpop.f32.mrb[0].mxu0
      %v2607 = vadd.f32 %v2446, %v2606
      %v2608 = vpop.f32.mrb[0].mxu0
      %v2609 = vpop.f32.mrb[0].mxu0
      %v2610 = vadd.f32 %v2449, %v2609
      %v2611 = vpop.f32.mrb[0].mxu0
      %2612 = vmatprep.mubr.bf16.mxu0 0
      %2613 = vmatmul.mubr.bf16.gmra.mrb[0].mxu0 %v1255
      %v2614 = vpop.f32.mrb[0].mxu0
      %v2615 = vadd.f32 %v2454, %v2614
      %v2616 = vpop.f32.mrb[0].mxu0
      %v2617 = vpop.f32.mrb[0].mxu0
      %v2618 = vadd.f32 %v2457, %v2617
      %v2619 = vpop.f32.mrb[0].mxu0
      %2620 = vmatprep.mubr.bf16.mxu0 0
      %2621 = vmatmul.mubr.bf16.gmra.mrb[0].mxu0 %v1240
      %v2622 = vpop.f32.mrb[0].mxu0
      %v2623 = vadd.f32 %v2462, %v2622
      %v2624 = vpop.f32.mrb[0].mxu0
      %v2625 = vpop.f32.mrb[0].mxu0
      %v2626 = vadd.f32 %v2465, %v2625
      %v2627 = vpop.f32.mrb[0].mxu0
      %2628 = vmatprep.mubr.bf16.mxu0 0
      %2629 = vmatmul.mubr.bf16.gmra.mrb[0].mxu0 %v1241
      %v2630 = vpop.f32.mrb[0].mxu0
      %v2631 = vadd.f32 %v2470, %v2630
      %v2632 = vpop.f32.mrb[0].mxu0
      %v2633 = vpop.f32.mrb[0].mxu0
      %v2634 = vadd.f32 %v2473, %v2633
      %v2635 = vpop.f32.mrb[0].mxu0
      %2636 = vdwg.mxu0
      %v2637 = vmul.f32 %v2511, 0.1
      %v2638 = vmul.f32 %v2514, 0.1
      %v2639 = vmul.f32 %v2519, 0.1
      %v2640 = vmul.f32 %v2522, 0.1
      %v2641 = vmul.f32 %v2527, 0.1
      %v2642 = vmul.f32 %v2530, 0.1
      %v2643 = vmul.f32 %v2535, 0.1
      %v2644 = vmul.f32 %v2538, 0.1
      %v2645 = vmul.f32 %v2543, 0.1
      %v2646 = vmul.f32 %v2546, 0.1
      %v2647 = vmul.f32 %v2551, 0.1
      %v2648 = vmul.f32 %v2554, 0.1
      %v2649 = vmul.f32 %v2559, 0.1
      %v2650 = vmul.f32 %v2562, 0.1
      %v2651 = vmul.f32 %v2567, 0.1
      %v2652 = vmul.f32 %v2570, 0.1
      %v2653 = vmul.f32 %v2575, 0.1
      %v2654 = vmul.f32 %v2578, 0.1
      %v2655 = vmul.f32 %v2583, 0.1
      %v2656 = vmul.f32 %v2586, 0.1
      %v2657 = vmul.f32 %v2591, 0.1
      %v2658 = vmul.f32 %v2594, 0.1
      %v2659 = vmul.f32 %v2599, 0.1
      %v2660 = vmul.f32 %v2602, 0.1
      %v2661 = vmul.f32 %v2607, 0.1
      %v2662 = vmul.f32 %v2610, 0.1
      %v2663 = vmul.f32 %v2615, 0.1
      %v2664 = vmul.f32 %v2618, 0.1
      %v2665 = vmul.f32 %v2623, 0.1
      %v2666 = vmul.f32 %v2626, 0.1
      %v2667 = vmul.f32 %v2631, 0.1
      %v2668 = vmul.f32 %v2634, 0.1
      %v2669 = vmax.f32 %v2511, %v2637
      %v2670 = vmax.f32 %v2514, %v2638
      %v2671 = vmax.f32 %v2519, %v2639
      %v2672 = vmax.f32 %v2522, %v2640
      %v2673 = vmax.f32 %v2527, %v2641
      %v2674 = vmax.f32 %v2530, %v2642
      %v2675 = vmax.f32 %v2535, %v2643
      %v2676 = vmax.f32 %v2538, %v2644
      %v2677 = vmax.f32 %v2543, %v2645
      %v2678 = vmax.f32 %v2546, %v2646
      %v2679 = vmax.f32 %v2551, %v2647
      %v2680 = vmax.f32 %v2554, %v2648
      %v2681 = vmax.f32 %v2559, %v2649
      %v2682 = vmax.f32 %v2562, %v2650
      %v2683 = vmax.f32 %v2567, %v2651
      %v2684 = vmax.f32 %v2570, %v2652
      %v2685 = vmax.f32 %v2575, %v2653
      %v2686 = vmax.f32 %v2578, %v2654
      %v2687 = vmax.f32 %v2583, %v2655
      %v2688 = vmax.f32 %v2586, %v2656
      %v2689 = vmax.f32 %v2591, %v2657
      %v2690 = vmax.f32 %v2594, %v2658
      %v2691 = vmax.f32 %v2599, %v2659
      %v2692 = vmax.f32 %v2602, %v2660
      %v2693 = vmax.f32 %v2607, %v2661
      %v2694 = vmax.f32 %v2610, %v2662
      %v2695 = vmax.f32 %v2615, %v2663
      %v2696 = vmax.f32 %v2618, %v2664
      %v2697 = vmax.f32 %v2623, %v2665
      %v2698 = vmax.f32 %v2626, %v2666
      %v2699 = vmax.f32 %v2631, %v2667
      %v2700 = vmax.f32 %v2634, %v2668
      %2701 = vst [vmem:[%s175] sm:$0xff] %v2669
      %2702 = vst [vmem:[%s175 + $0x8] sm:$0xff] %v2670
      %2703 = vst [vmem:[%s175 + $0x10] sm:$0xff] %v2671
      %2704 = vst [vmem:[%s175 + $0x18] sm:$0xff] %v2672
      %2705 = vst [vmem:[%s175 + $0x20] sm:$0xff] %v2673
      %2706 = vst [vmem:[%s175 + $0x28] sm:$0xff] %v2674
      %2707 = vst [vmem:[%s175 + $0x30] sm:$0xff] %v2675
      %2708 = vst [vmem:[%s175 + $0x38] sm:$0xff] %v2676
      %2709 = vst [vmem:[%s175 + $0x40] sm:$0xff] %v2677
      %2710 = vst [vmem:[%s175 + $0x48] sm:$0xff] %v2678
      %2711 = vst [vmem:[%s175 + $0x50] sm:$0xff] %v2679
      %2712 = vst [vmem:[%s175 + $0x58] sm:$0xff] %v2680
      %2713 = vst [vmem:[%s175 + $0x60] sm:$0xff] %v2681
      %2714 = vst [vmem:[%s175 + $0x68] sm:$0xff] %v2682
      %2715 = vst [vmem:[%s175 + $0x70] sm:$0xff] %v2683
      %2716 = vst [vmem:[%s175 + $0x78] sm:$0xff] %v2684
      %2717 = vst [vmem:[%s175 + $0x80] sm:$0xff] %v2685
      %2718 = vst [vmem:[%s175 + $0x88] sm:$0xff] %v2686
      %2719 = vst [vmem:[%s175 + $0x90] sm:$0xff] %v2687
      %2720 = vst [vmem:[%s175 + $0x98] sm:$0xff] %v2688
      %2721 = vst [vmem:[%s175 + $0xa0] sm:$0xff] %v2689
      %2722 = vst [vmem:[%s175 + $0xa8] sm:$0xff] %v2690
      %2723 = vst [vmem:[%s175 + $0xb0] sm:$0xff] %v2691
      %2724 = vst [vmem:[%s175 + $0xb8] sm:$0xff] %v2692
      %2725 = vst [vmem:[%s175 + $0xc0] sm:$0xff] %v2693
      %2726 = vst [vmem:[%s175 + $0xc8] sm:$0xff] %v2694
      %2727 = vst [vmem:[%s175 + $0xd0] sm:$0xff] %v2695
      %2728 = vst [vmem:[%s175 + $0xd8] sm:$0xff] %v2696
      %2729 = vst [vmem:[%s175 + $0xe0] sm:$0xff] %v2697
      %2730 = vst [vmem:[%s175 + $0xe8] sm:$0xff] %v2698
      %2731 = vst [vmem:[%s175 + $0xf0] sm:$0xff] %v2699
      %2732 = vst [vmem:[%s175 + $0xf8] sm:$0xff] %v2700
      %s2733 = smul.u32 32, %s14
      %p2734 = scmp.lt.s32.totalorder %s2733, 63
      %s2735 = scalar_select %p2734, %s2733, 63
      %s2736 = smul.addr %s2735, 8
      %s2737 = scalar_lea.vmem %s3, %s2736
      // Predicated region
      $region33: #{lpr_classifier1_forward.1} parent=31 // pred_check
        %p2738 = pneg %p100
      $region34: #{lpr_classifier1_forward.1} parent=31 // pred_check_branch
        %2740 = sbr.rel (%p2738) target = $region36
      $region35: #{lpr_classifier1_forward.1} parent=31 // pred_region
        %s2741 = smul.u32 32, %s14
      $region36: #{lpr_classifier1_forward.1} parent=31 // pred_fallthru
        _
    $region32: #{lpr_classifier1_forward.1} parent=5 // pred_fallthru
      _
    %p2742 = scmp.le.s32.totalorder 2, %s9
    // Predicated region
    $region37: #{lpr_classifier1_forward.1} parent=5 // pred_check
      %p2743 = pneg %p2742
    $region38: #{lpr_classifier1_forward.1} parent=5 // pred_check_branch
      %2745 = sbr.rel (%p2743) target = $region40
    $region39: #{lpr_classifier1_forward.1} parent=5 // pred_region
      %s2746 = ssub.s32 %s9, 2
      // Predicated region
      $region41: #{lpr_classifier1_forward.1} parent=39 // pred_check
        %p2747 = pneg %p106
      $region42: #{lpr_classifier1_forward.1} parent=39 // pred_check_branch
        %2749 = sbr.rel (%p2747) target = $region44
      $region43: #{lpr_classifier1_forward.1} parent=39 // pred_region
        %s2750 = smul.u32 32, %s15
        %p2751 = scmp.lt.s32.totalorder %s2750, 63
        %s2752 = scalar_select %p2751, %s2750, 63
        %s2753 = smul.addr %s2752, 8
        %s2754 = scalar_lea.vmem %s3, %s2753
      $region44: #{lpr_classifier1_forward.1} parent=39 // pred_fallthru
        _
    $region40: #{lpr_classifier1_forward.1} parent=5 // pred_fallthru
      _
  $region6: #{lpr_classifier1_forward.1} parent=0 // loop_footer
    %s13 = sadd.s32 1, %s9
  $region7: #{lpr_classifier1_forward.1} parent=0 // loop_footer_branch
    %8 = sbr.rel target = $region3
  $region8: #{lpr_classifier1_forward.1} parent=0 // loop_exit
    _

</llo_original>
